<compile_context>
chip_gen: v5e
topology: v5e:2x2
jax: 0.10.0
libtpu: 0.0.40
codegen_flags: <defaults>
</compile_context>

<pallas_src>
import jax
import jax.numpy as jnp
from jax.experimental import pallas as pl
from jax.experimental.pallas import tpu as pltpu

# Model hyper-parameters (small, consistent with the module's __init__)
B = 2          # batch
S = 8          # sequence length
D = 32         # input_size
H = 8          # n_heads
DK = 16        # d_k
DV = 16        # d_v


def transformer_block_kernel(q_ref, k_ref, v_ref,
                             wq_ref, wk_ref, wv_ref, wo_ref,
                             w1_ref, b1_ref, w2_ref, b2_ref,
                             out_ref):
    # Activations are flattened to (B*S, D) = (16, 32) by the wrapper.
    Q2 = q_ref[...]
    K2 = k_ref[...]
    V2 = v_ref[...]

    # Fused projections: one (16,32)@(32,128) matmul each — N exactly fills
    # the 128-lane MXU width.
    Qp = jnp.dot(Q2, wq_ref[...], preferred_element_type=jnp.float32)   # (B*S, H*DK)
    Kp = jnp.dot(K2, wk_ref[...], preferred_element_type=jnp.float32)   # (B*S, H*DK)
    Vp = jnp.dot(V2, wv_ref[...], preferred_element_type=jnp.float32)   # (B*S, H*DV)

    scale = 1.0 / (DK ** 0.5 + 1e-6)

    # Per-head attention (static loop), batched over B with dot_general batch
    # dims so each head issues back-to-back MXU pushes.
    att_heads = []
    for h in range(H):
        lo = h * DK
        Qh = Qp[:, lo:lo + DK].reshape(B, S, DK)
        Kh = Kp[:, lo:lo + DK].reshape(B, S, DK)
        Vh = Vp[:, h * DV:(h + 1) * DV].reshape(B, S, DV)

        s = jnp.einsum('bqd,bkd->bqk', Qh, Kh,
                       preferred_element_type=jnp.float32) * scale       # (B,S,S)
        s = s - jnp.max(s, axis=-1, keepdims=True)
        p = jnp.exp(s)
        # EUP approximate reciprocal — its VLIW slot is otherwise idle here.
        inv = pl.reciprocal(jnp.sum(p, axis=-1, keepdims=True), approx=True)
        # TODO(synk): attention dropout (p=0.1) omitted — identity in eval mode.
        att = jnp.einsum('bqk,bkd->bqd', p, Vh,
                         preferred_element_type=jnp.float32)              # (B,S,DV)
        att_heads.append((att * inv).reshape(B * S, DV))

    # Concat heads on the lane dim -> (B*S, H*DV) = (16, 128), then one output
    # projection with a full 128-deep contraction.
    att_cat = jnp.concatenate(att_heads, axis=-1)
    v_att = jnp.dot(att_cat, wo_ref[...], preferred_element_type=jnp.float32)  # (B*S, D)

    X = Q2 + v_att                                                        # residual 1

    # FFN: linear2(relu(linear1(X))) ; linear weights pre-transposed -> x @ Wt + b
    h1 = jnp.dot(X, w1_ref[...], preferred_element_type=jnp.float32) + b1_ref[...]
    h1 = jnp.maximum(h1, 0.0)
    ffn = jnp.dot(h1, w2_ref[...], preferred_element_type=jnp.float32) + b2_ref[...]
    # TODO(synk): FFN/output dropout (p=0.1) omitted — identity in eval mode.

    out_ref[...] = (ffn + X).astype(out_ref.dtype)                        # residual 2


def transformer_block(Q, K, V, params):
    wq, wk, wv, wo, w1t, b1, w2t, b2 = params
    q2 = Q.reshape(B * S, D)
    k2 = K.reshape(B * S, D)
    v2 = V.reshape(B * S, D)

    vmem = pl.BlockSpec(memory_space=pltpu.MemorySpace.VMEM)  # whole array in VMEM
    out2 = pl.pallas_call(
        transformer_block_kernel,
        out_shape=jax.ShapeDtypeStruct((B * S, D), jnp.float32),
        in_specs=[vmem] * 11,
        out_specs=vmem,
    )(q2, k2, v2, wq, wk, wv, wo, w1t, b1, w2t, b2)
    return out2.reshape(B, S, D)


def xavier_normal(key, shape):
    fan_in, fan_out = shape[0], shape[1]
    std = (2.0 / (fan_in + fan_out)) ** 0.5
    return std * jax.random.normal(key, shape, dtype=jnp.float32)


def make_params(key):
    ks = jax.random.split(key, 8)
    W_q = xavier_normal(ks[0], (D, H * DK))     # fused layout (32, 128)
    W_k = xavier_normal(ks[1], (D, H * DK))
    W_v = xavier_normal(ks[2], (D, H * DV))
    W_o = xavier_normal(ks[3], (H * DV, D))     # (128, 32)
    W1 = xavier_normal(ks[4], (D, D))           # nn.Linear weight (out, in)
    W2 = xavier_normal(ks[5], (D, D))
    b1 = 0.01 * jax.random.normal(ks[6], (D,), dtype=jnp.float32)
    b2 = 0.01 * jax.random.normal(ks[7], (D,), dtype=jnp.float32)
    return (W_q, W_k, W_v, W_o, W1.T, b1.reshape(1, D), W2.T, b2.reshape(1, D))


def reference(Q, K, V, params):
    """Plain-JAX reference mirroring the PyTorch forward (eval mode)."""
    wq, wk, wv, wo, w1t, b1, w2t, b2 = params
    Qh = (Q @ wq).reshape(B, S, H, DK).transpose(0, 2, 1, 3)   # (B,H,S,DK)
    Kh = (K @ wk).reshape(B, S, H, DK).transpose(0, 2, 1, 3)
    Vh = (V @ wv).reshape(B, S, H, DV).transpose(0, 2, 1, 3)
    scores = jnp.einsum('bhqe,bhke->bhqk', Qh, Kh) / (DK ** 0.5 + 1e-6)
    p = jax.nn.softmax(scores, axis=-1)
    att = jnp.einsum('bhqk,bhke->bhqe', p, Vh)                 # (B,H,S,DV)
    att = att.transpose(0, 2, 1, 3).reshape(B, S, H * DV)
    v_att = att @ wo
    X = Q + v_att
    h1 = jnp.maximum(jnp.einsum('bqd,de->bqe', X, w1t) + b1[0], 0.0)
    ffn = jnp.einsum('bqd,de->bqe', h1, w2t) + b2[0]
    return ffn + X


if __name__ == "__main__":
    key = jax.random.PRNGKey(0)
    kq, kk, kv, kp = jax.random.split(key, 4)
    Q = jax.random.normal(kq, (B, S, D), dtype=jnp.float32)
    K = jax.random.normal(kk, (B, S, D), dtype=jnp.float32)
    V = jax.random.normal(kv, (B, S, D), dtype=jnp.float32)
    params = make_params(kp)

    out = transformer_block(Q, K, V, params)
    out = jax.block_until_ready(out)

    ref = reference(Q, K, V, params)
    assert out.shape == (B, S, D)
    # Tolerance relaxed vs the exact-softmax reference because the kernel uses
    # the EUP approximate reciprocal (pl.reciprocal(..., approx=True)).
    assert jnp.allclose(out, ref, atol=1e-2, rtol=1e-2), "mismatch vs reference"
    print("KERNEL_OK")
</pallas_src>

<mosaic_0001>
module attributes {stable_mosaic.version = 11 : i64} {
  func.func @transformer_block_kernel(%arg0: memref<16x32xf32, #tpu.memory_space<vmem>>, %arg1: memref<16x32xf32, #tpu.memory_space<vmem>>, %arg2: memref<16x32xf32, #tpu.memory_space<vmem>>, %arg3: memref<32x128xf32, #tpu.memory_space<vmem>>, %arg4: memref<32x128xf32, #tpu.memory_space<vmem>>, %arg5: memref<32x128xf32, #tpu.memory_space<vmem>>, %arg6: memref<128x32xf32, #tpu.memory_space<vmem>>, %arg7: memref<32x32xf32, #tpu.memory_space<vmem>>, %arg8: memref<1x32xf32, #tpu.memory_space<vmem>>, %arg9: memref<32x32xf32, #tpu.memory_space<vmem>>, %arg10: memref<1x32xf32, #tpu.memory_space<vmem>>, %arg11: memref<16x32xf32, #tpu.memory_space<vmem>>) attributes {dimension_semantics = [], scalar_prefetch = 0 : i64, scratch_operands = 0 : i64, tpu.core_type = #tpu.core_type<tc>} {
    %c0 = arith.constant 0 : index
    %c0_0 = arith.constant 0 : index
    %0 = vector.load %arg0[%c0, %c0_0] : memref<16x32xf32, #tpu.memory_space<vmem>>, vector<16x32xf32>
    %c0_1 = arith.constant 0 : index
    %c0_2 = arith.constant 0 : index
    %1 = vector.load %arg1[%c0_1, %c0_2] : memref<16x32xf32, #tpu.memory_space<vmem>>, vector<16x32xf32>
    %c0_3 = arith.constant 0 : index
    %c0_4 = arith.constant 0 : index
    %2 = vector.load %arg2[%c0_3, %c0_4] : memref<16x32xf32, #tpu.memory_space<vmem>>, vector<16x32xf32>
    %c0_5 = arith.constant 0 : index
    %c0_6 = arith.constant 0 : index
    %3 = vector.load %arg3[%c0_5, %c0_6] : memref<32x128xf32, #tpu.memory_space<vmem>>, vector<32x128xf32>
    %cst = arith.constant dense<0.000000e+00> : vector<16x128xf32>
    %4 = tpu.matmul %0, %3, %cst {dimension_numbers = #tpu.dot_dimension_numbers<[1], [0], [0], [1], [0, 0, 1, 1], [], []>} : vector<16x32xf32>, vector<32x128xf32>, vector<16x128xf32> -> vector<16x128xf32>
    %c0_7 = arith.constant 0 : index
    %c0_8 = arith.constant 0 : index
    %5 = vector.load %arg4[%c0_7, %c0_8] : memref<32x128xf32, #tpu.memory_space<vmem>>, vector<32x128xf32>
    %cst_9 = arith.constant dense<0.000000e+00> : vector<16x128xf32>
    %6 = tpu.matmul %1, %5, %cst_9 {dimension_numbers = #tpu.dot_dimension_numbers<[1], [0], [0], [1], [0, 0, 1, 1], [], []>} : vector<16x32xf32>, vector<32x128xf32>, vector<16x128xf32> -> vector<16x128xf32>
    %c0_10 = arith.constant 0 : index
    %c0_11 = arith.constant 0 : index
    %7 = vector.load %arg5[%c0_10, %c0_11] : memref<32x128xf32, #tpu.memory_space<vmem>>, vector<32x128xf32>
    %cst_12 = arith.constant dense<0.000000e+00> : vector<16x128xf32>
    %8 = tpu.matmul %2, %7, %cst_12 {dimension_numbers = #tpu.dot_dimension_numbers<[1], [0], [0], [1], [0, 0, 1, 1], [], []>} : vector<16x32xf32>, vector<32x128xf32>, vector<16x128xf32> -> vector<16x128xf32>
    %9 = vector.extract_strided_slice %4 {offsets = [0, 0], sizes = [16, 16], strides = [1, 1]} : vector<16x128xf32> to vector<16x16xf32>
    %10 = vector.shape_cast %9 : vector<16x16xf32> to vector<2x8x16xf32>
    %11 = vector.extract_strided_slice %6 {offsets = [0, 0], sizes = [16, 16], strides = [1, 1]} : vector<16x128xf32> to vector<16x16xf32>
    %12 = vector.shape_cast %11 : vector<16x16xf32> to vector<2x8x16xf32>
    %13 = vector.extract_strided_slice %8 {offsets = [0, 0], sizes = [16, 16], strides = [1, 1]} : vector<16x128xf32> to vector<16x16xf32>
    %14 = vector.shape_cast %13 : vector<16x16xf32> to vector<2x8x16xf32>
    "tpu.trace_start"() <{level = 10 : i32, message = "bqd,bkd->bqk"}> : () -> ()
    %cst_13 = arith.constant dense<0.000000e+00> : vector<2x8x8xf32>
    %15 = tpu.matmul %10, %12, %cst_13 {dimension_numbers = #tpu.dot_dimension_numbers<[2], [2], [1], [1], [0, 0, 0, 1, 1, 1], [0], [0]>} : vector<2x8x16xf32>, vector<2x8x16xf32>, vector<2x8x8xf32> -> vector<2x8x8xf32>
    "tpu.trace_stop"() : () -> ()
    %cst_14 = arith.constant 0.24999994 : f32
    %16 = vector.broadcast %cst_14 : f32 to vector<2x8x8xf32>
    %17 = arith.mulf %15, %16 : vector<2x8x8xf32>
    %cst_15 = arith.constant dense<0xFF800000> : vector<2x8xf32>
    %18 = vector.multi_reduction <maximumf>, %17, %cst_15 [2] : vector<2x8x8xf32> to vector<2x8xf32>
    %19 = vector.shape_cast %18 : vector<2x8xf32> to vector<2x8x1xf32>
    %20 = vector.broadcast %19 : vector<2x8x1xf32> to vector<2x8x8xf32>
    %21 = arith.subf %17, %20 : vector<2x8x8xf32>
    %22 = math.exp %21 : vector<2x8x8xf32>
    %cst_16 = arith.constant dense<0.000000e+00> : vector<2x8xf32>
    %23 = vector.multi_reduction <add>, %22, %cst_16 [2] : vector<2x8x8xf32> to vector<2x8xf32>
    %24 = vector.shape_cast %23 : vector<2x8xf32> to vector<2x8x1xf32>
    %25 = tpu.reciprocal %24 {approx = true} : vector<2x8x1xf32> -> vector<2x8x1xf32>
    "tpu.trace_start"() <{level = 10 : i32, message = "bqk,bkd->bqd"}> : () -> ()
    %cst_17 = arith.constant dense<0.000000e+00> : vector<2x8x16xf32>
    %26 = tpu.matmul %22, %14, %cst_17 {dimension_numbers = #tpu.dot_dimension_numbers<[2], [1], [1], [2], [0, 0, 0, 1, 1, 2], [0], [0]>} : vector<2x8x8xf32>, vector<2x8x16xf32>, vector<2x8x16xf32> -> vector<2x8x16xf32>
    "tpu.trace_stop"() : () -> ()
    %27 = vector.broadcast %25 : vector<2x8x1xf32> to vector<2x8x16xf32>
    %28 = arith.mulf %26, %27 : vector<2x8x16xf32>
    %29 = vector.shape_cast %28 : vector<2x8x16xf32> to vector<16x16xf32>
    %30 = vector.extract_strided_slice %4 {offsets = [0, 16], sizes = [16, 16], strides = [1, 1]} : vector<16x128xf32> to vector<16x16xf32>
    %31 = vector.shape_cast %30 : vector<16x16xf32> to vector<2x8x16xf32>
    %32 = vector.extract_strided_slice %6 {offsets = [0, 16], sizes = [16, 16], strides = [1, 1]} : vector<16x128xf32> to vector<16x16xf32>
    %33 = vector.shape_cast %32 : vector<16x16xf32> to vector<2x8x16xf32>
    %34 = vector.extract_strided_slice %8 {offsets = [0, 16], sizes = [16, 16], strides = [1, 1]} : vector<16x128xf32> to vector<16x16xf32>
    %35 = vector.shape_cast %34 : vector<16x16xf32> to vector<2x8x16xf32>
    "tpu.trace_start"() <{level = 10 : i32, message = "bqd,bkd->bqk"}> : () -> ()
    %cst_18 = arith.constant dense<0.000000e+00> : vector<2x8x8xf32>
    %36 = tpu.matmul %31, %33, %cst_18 {dimension_numbers = #tpu.dot_dimension_numbers<[2], [2], [1], [1], [0, 0, 0, 1, 1, 1], [0], [0]>} : vector<2x8x16xf32>, vector<2x8x16xf32>, vector<2x8x8xf32> -> vector<2x8x8xf32>
    "tpu.trace_stop"() : () -> ()
    %cst_19 = arith.constant 0.24999994 : f32
    %37 = vector.broadcast %cst_19 : f32 to vector<2x8x8xf32>
    %38 = arith.mulf %36, %37 : vector<2x8x8xf32>
    %cst_20 = arith.constant dense<0xFF800000> : vector<2x8xf32>
    %39 = vector.multi_reduction <maximumf>, %38, %cst_20 [2] : vector<2x8x8xf32> to vector<2x8xf32>
    %40 = vector.shape_cast %39 : vector<2x8xf32> to vector<2x8x1xf32>
    %41 = vector.broadcast %40 : vector<2x8x1xf32> to vector<2x8x8xf32>
    %42 = arith.subf %38, %41 : vector<2x8x8xf32>
    %43 = math.exp %42 : vector<2x8x8xf32>
    %cst_21 = arith.constant dense<0.000000e+00> : vector<2x8xf32>
    %44 = vector.multi_reduction <add>, %43, %cst_21 [2] : vector<2x8x8xf32> to vector<2x8xf32>
    %45 = vector.shape_cast %44 : vector<2x8xf32> to vector<2x8x1xf32>
    %46 = tpu.reciprocal %45 {approx = true} : vector<2x8x1xf32> -> vector<2x8x1xf32>
    "tpu.trace_start"() <{level = 10 : i32, message = "bqk,bkd->bqd"}> : () -> ()
    %cst_22 = arith.constant dense<0.000000e+00> : vector<2x8x16xf32>
    %47 = tpu.matmul %43, %35, %cst_22 {dimension_numbers = #tpu.dot_dimension_numbers<[2], [1], [1], [2], [0, 0, 0, 1, 1, 2], [0], [0]>} : vector<2x8x8xf32>, vector<2x8x16xf32>, vector<2x8x16xf32> -> vector<2x8x16xf32>
    "tpu.trace_stop"() : () -> ()
    %48 = vector.broadcast %46 : vector<2x8x1xf32> to vector<2x8x16xf32>
    %49 = arith.mulf %47, %48 : vector<2x8x16xf32>
    %50 = vector.shape_cast %49 : vector<2x8x16xf32> to vector<16x16xf32>
    %51 = vector.extract_strided_slice %4 {offsets = [0, 32], sizes = [16, 16], strides = [1, 1]} : vector<16x128xf32> to vector<16x16xf32>
    %52 = vector.shape_cast %51 : vector<16x16xf32> to vector<2x8x16xf32>
    %53 = vector.extract_strided_slice %6 {offsets = [0, 32], sizes = [16, 16], strides = [1, 1]} : vector<16x128xf32> to vector<16x16xf32>
    %54 = vector.shape_cast %53 : vector<16x16xf32> to vector<2x8x16xf32>
    %55 = vector.extract_strided_slice %8 {offsets = [0, 32], sizes = [16, 16], strides = [1, 1]} : vector<16x128xf32> to vector<16x16xf32>
    %56 = vector.shape_cast %55 : vector<16x16xf32> to vector<2x8x16xf32>
    "tpu.trace_start"() <{level = 10 : i32, message = "bqd,bkd->bqk"}> : () -> ()
    %cst_23 = arith.constant dense<0.000000e+00> : vector<2x8x8xf32>
    %57 = tpu.matmul %52, %54, %cst_23 {dimension_numbers = #tpu.dot_dimension_numbers<[2], [2], [1], [1], [0, 0, 0, 1, 1, 1], [0], [0]>} : vector<2x8x16xf32>, vector<2x8x16xf32>, vector<2x8x8xf32> -> vector<2x8x8xf32>
    "tpu.trace_stop"() : () -> ()
    %cst_24 = arith.constant 0.24999994 : f32
    %58 = vector.broadcast %cst_24 : f32 to vector<2x8x8xf32>
    %59 = arith.mulf %57, %58 : vector<2x8x8xf32>
    %cst_25 = arith.constant dense<0xFF800000> : vector<2x8xf32>
    %60 = vector.multi_reduction <maximumf>, %59, %cst_25 [2] : vector<2x8x8xf32> to vector<2x8xf32>
    %61 = vector.shape_cast %60 : vector<2x8xf32> to vector<2x8x1xf32>
    %62 = vector.broadcast %61 : vector<2x8x1xf32> to vector<2x8x8xf32>
    %63 = arith.subf %59, %62 : vector<2x8x8xf32>
    %64 = math.exp %63 : vector<2x8x8xf32>
    %cst_26 = arith.constant dense<0.000000e+00> : vector<2x8xf32>
    %65 = vector.multi_reduction <add>, %64, %cst_26 [2] : vector<2x8x8xf32> to vector<2x8xf32>
    %66 = vector.shape_cast %65 : vector<2x8xf32> to vector<2x8x1xf32>
    %67 = tpu.reciprocal %66 {approx = true} : vector<2x8x1xf32> -> vector<2x8x1xf32>
    "tpu.trace_start"() <{level = 10 : i32, message = "bqk,bkd->bqd"}> : () -> ()
    %cst_27 = arith.constant dense<0.000000e+00> : vector<2x8x16xf32>
    %68 = tpu.matmul %64, %56, %cst_27 {dimension_numbers = #tpu.dot_dimension_numbers<[2], [1], [1], [2], [0, 0, 0, 1, 1, 2], [0], [0]>} : vector<2x8x8xf32>, vector<2x8x16xf32>, vector<2x8x16xf32> -> vector<2x8x16xf32>
    "tpu.trace_stop"() : () -> ()
    %69 = vector.broadcast %67 : vector<2x8x1xf32> to vector<2x8x16xf32>
    %70 = arith.mulf %68, %69 : vector<2x8x16xf32>
    %71 = vector.shape_cast %70 : vector<2x8x16xf32> to vector<16x16xf32>
    %72 = vector.extract_strided_slice %4 {offsets = [0, 48], sizes = [16, 16], strides = [1, 1]} : vector<16x128xf32> to vector<16x16xf32>
    %73 = vector.shape_cast %72 : vector<16x16xf32> to vector<2x8x16xf32>
    %74 = vector.extract_strided_slice %6 {offsets = [0, 48], sizes = [16, 16], strides = [1, 1]} : vector<16x128xf32> to vector<16x16xf32>
    %75 = vector.shape_cast %74 : vector<16x16xf32> to vector<2x8x16xf32>
    %76 = vector.extract_strided_slice %8 {offsets = [0, 48], sizes = [16, 16], strides = [1, 1]} : vector<16x128xf32> to vector<16x16xf32>
    %77 = vector.shape_cast %76 : vector<16x16xf32> to vector<2x8x16xf32>
    "tpu.trace_start"() <{level = 10 : i32, message = "bqd,bkd->bqk"}> : () -> ()
    %cst_28 = arith.constant dense<0.000000e+00> : vector<2x8x8xf32>
    %78 = tpu.matmul %73, %75, %cst_28 {dimension_numbers = #tpu.dot_dimension_numbers<[2], [2], [1], [1], [0, 0, 0, 1, 1, 1], [0], [0]>} : vector<2x8x16xf32>, vector<2x8x16xf32>, vector<2x8x8xf32> -> vector<2x8x8xf32>
    "tpu.trace_stop"() : () -> ()
    %cst_29 = arith.constant 0.24999994 : f32
    %79 = vector.broadcast %cst_29 : f32 to vector<2x8x8xf32>
    %80 = arith.mulf %78, %79 : vector<2x8x8xf32>
    %cst_30 = arith.constant dense<0xFF800000> : vector<2x8xf32>
    %81 = vector.multi_reduction <maximumf>, %80, %cst_30 [2] : vector<2x8x8xf32> to vector<2x8xf32>
    %82 = vector.shape_cast %81 : vector<2x8xf32> to vector<2x8x1xf32>
    %83 = vector.broadcast %82 : vector<2x8x1xf32> to vector<2x8x8xf32>
    %84 = arith.subf %80, %83 : vector<2x8x8xf32>
    %85 = math.exp %84 : vector<2x8x8xf32>
    %cst_31 = arith.constant dense<0.000000e+00> : vector<2x8xf32>
    %86 = vector.multi_reduction <add>, %85, %cst_31 [2] : vector<2x8x8xf32> to vector<2x8xf32>
    %87 = vector.shape_cast %86 : vector<2x8xf32> to vector<2x8x1xf32>
    %88 = tpu.reciprocal %87 {approx = true} : vector<2x8x1xf32> -> vector<2x8x1xf32>
    "tpu.trace_start"() <{level = 10 : i32, message = "bqk,bkd->bqd"}> : () -> ()
    %cst_32 = arith.constant dense<0.000000e+00> : vector<2x8x16xf32>
    %89 = tpu.matmul %85, %77, %cst_32 {dimension_numbers = #tpu.dot_dimension_numbers<[2], [1], [1], [2], [0, 0, 0, 1, 1, 2], [0], [0]>} : vector<2x8x8xf32>, vector<2x8x16xf32>, vector<2x8x16xf32> -> vector<2x8x16xf32>
    "tpu.trace_stop"() : () -> ()
    %90 = vector.broadcast %88 : vector<2x8x1xf32> to vector<2x8x16xf32>
    %91 = arith.mulf %89, %90 : vector<2x8x16xf32>
    %92 = vector.shape_cast %91 : vector<2x8x16xf32> to vector<16x16xf32>
    %93 = vector.extract_strided_slice %4 {offsets = [0, 64], sizes = [16, 16], strides = [1, 1]} : vector<16x128xf32> to vector<16x16xf32>
    %94 = vector.shape_cast %93 : vector<16x16xf32> to vector<2x8x16xf32>
    %95 = vector.extract_strided_slice %6 {offsets = [0, 64], sizes = [16, 16], strides = [1, 1]} : vector<16x128xf32> to vector<16x16xf32>
    %96 = vector.shape_cast %95 : vector<16x16xf32> to vector<2x8x16xf32>
    %97 = vector.extract_strided_slice %8 {offsets = [0, 64], sizes = [16, 16], strides = [1, 1]} : vector<16x128xf32> to vector<16x16xf32>
    %98 = vector.shape_cast %97 : vector<16x16xf32> to vector<2x8x16xf32>
    "tpu.trace_start"() <{level = 10 : i32, message = "bqd,bkd->bqk"}> : () -> ()
    %cst_33 = arith.constant dense<0.000000e+00> : vector<2x8x8xf32>
    %99 = tpu.matmul %94, %96, %cst_33 {dimension_numbers = #tpu.dot_dimension_numbers<[2], [2], [1], [1], [0, 0, 0, 1, 1, 1], [0], [0]>} : vector<2x8x16xf32>, vector<2x8x16xf32>, vector<2x8x8xf32> -> vector<2x8x8xf32>
    "tpu.trace_stop"() : () -> ()
    %cst_34 = arith.constant 0.24999994 : f32
    %100 = vector.broadcast %cst_34 : f32 to vector<2x8x8xf32>
    %101 = arith.mulf %99, %100 : vector<2x8x8xf32>
    %cst_35 = arith.constant dense<0xFF800000> : vector<2x8xf32>
    %102 = vector.multi_reduction <maximumf>, %101, %cst_35 [2] : vector<2x8x8xf32> to vector<2x8xf32>
    %103 = vector.shape_cast %102 : vector<2x8xf32> to vector<2x8x1xf32>
    %104 = vector.broadcast %103 : vector<2x8x1xf32> to vector<2x8x8xf32>
    %105 = arith.subf %101, %104 : vector<2x8x8xf32>
    %106 = math.exp %105 : vector<2x8x8xf32>
    %cst_36 = arith.constant dense<0.000000e+00> : vector<2x8xf32>
    %107 = vector.multi_reduction <add>, %106, %cst_36 [2] : vector<2x8x8xf32> to vector<2x8xf32>
    %108 = vector.shape_cast %107 : vector<2x8xf32> to vector<2x8x1xf32>
    %109 = tpu.reciprocal %108 {approx = true} : vector<2x8x1xf32> -> vector<2x8x1xf32>
    "tpu.trace_start"() <{level = 10 : i32, message = "bqk,bkd->bqd"}> : () -> ()
    %cst_37 = arith.constant dense<0.000000e+00> : vector<2x8x16xf32>
    %110 = tpu.matmul %106, %98, %cst_37 {dimension_numbers = #tpu.dot_dimension_numbers<[2], [1], [1], [2], [0, 0, 0, 1, 1, 2], [0], [0]>} : vector<2x8x8xf32>, vector<2x8x16xf32>, vector<2x8x16xf32> -> vector<2x8x16xf32>
    "tpu.trace_stop"() : () -> ()
    %111 = vector.broadcast %109 : vector<2x8x1xf32> to vector<2x8x16xf32>
    %112 = arith.mulf %110, %111 : vector<2x8x16xf32>
    %113 = vector.shape_cast %112 : vector<2x8x16xf32> to vector<16x16xf32>
    %114 = vector.extract_strided_slice %4 {offsets = [0, 80], sizes = [16, 16], strides = [1, 1]} : vector<16x128xf32> to vector<16x16xf32>
    %115 = vector.shape_cast %114 : vector<16x16xf32> to vector<2x8x16xf32>
    %116 = vector.extract_strided_slice %6 {offsets = [0, 80], sizes = [16, 16], strides = [1, 1]} : vector<16x128xf32> to vector<16x16xf32>
    %117 = vector.shape_cast %116 : vector<16x16xf32> to vector<2x8x16xf32>
    %118 = vector.extract_strided_slice %8 {offsets = [0, 80], sizes = [16, 16], strides = [1, 1]} : vector<16x128xf32> to vector<16x16xf32>
    %119 = vector.shape_cast %118 : vector<16x16xf32> to vector<2x8x16xf32>
    "tpu.trace_start"() <{level = 10 : i32, message = "bqd,bkd->bqk"}> : () -> ()
    %cst_38 = arith.constant dense<0.000000e+00> : vector<2x8x8xf32>
    %120 = tpu.matmul %115, %117, %cst_38 {dimension_numbers = #tpu.dot_dimension_numbers<[2], [2], [1], [1], [0, 0, 0, 1, 1, 1], [0], [0]>} : vector<2x8x16xf32>, vector<2x8x16xf32>, vector<2x8x8xf32> -> vector<2x8x8xf32>
    "tpu.trace_stop"() : () -> ()
    %cst_39 = arith.constant 0.24999994 : f32
    %121 = vector.broadcast %cst_39 : f32 to vector<2x8x8xf32>
    %122 = arith.mulf %120, %121 : vector<2x8x8xf32>
    %cst_40 = arith.constant dense<0xFF800000> : vector<2x8xf32>
    %123 = vector.multi_reduction <maximumf>, %122, %cst_40 [2] : vector<2x8x8xf32> to vector<2x8xf32>
    %124 = vector.shape_cast %123 : vector<2x8xf32> to vector<2x8x1xf32>
    %125 = vector.broadcast %124 : vector<2x8x1xf32> to vector<2x8x8xf32>
    %126 = arith.subf %122, %125 : vector<2x8x8xf32>
    %127 = math.exp %126 : vector<2x8x8xf32>
    %cst_41 = arith.constant dense<0.000000e+00> : vector<2x8xf32>
    %128 = vector.multi_reduction <add>, %127, %cst_41 [2] : vector<2x8x8xf32> to vector<2x8xf32>
    %129 = vector.shape_cast %128 : vector<2x8xf32> to vector<2x8x1xf32>
    %130 = tpu.reciprocal %129 {approx = true} : vector<2x8x1xf32> -> vector<2x8x1xf32>
    "tpu.trace_start"() <{level = 10 : i32, message = "bqk,bkd->bqd"}> : () -> ()
    %cst_42 = arith.constant dense<0.000000e+00> : vector<2x8x16xf32>
    %131 = tpu.matmul %127, %119, %cst_42 {dimension_numbers = #tpu.dot_dimension_numbers<[2], [1], [1], [2], [0, 0, 0, 1, 1, 2], [0], [0]>} : vector<2x8x8xf32>, vector<2x8x16xf32>, vector<2x8x16xf32> -> vector<2x8x16xf32>
    "tpu.trace_stop"() : () -> ()
    %132 = vector.broadcast %130 : vector<2x8x1xf32> to vector<2x8x16xf32>
    %133 = arith.mulf %131, %132 : vector<2x8x16xf32>
    %134 = vector.shape_cast %133 : vector<2x8x16xf32> to vector<16x16xf32>
    %135 = vector.extract_strided_slice %4 {offsets = [0, 96], sizes = [16, 16], strides = [1, 1]} : vector<16x128xf32> to vector<16x16xf32>
    %136 = vector.shape_cast %135 : vector<16x16xf32> to vector<2x8x16xf32>
    %137 = vector.extract_strided_slice %6 {offsets = [0, 96], sizes = [16, 16], strides = [1, 1]} : vector<16x128xf32> to vector<16x16xf32>
    %138 = vector.shape_cast %137 : vector<16x16xf32> to vector<2x8x16xf32>
    %139 = vector.extract_strided_slice %8 {offsets = [0, 96], sizes = [16, 16], strides = [1, 1]} : vector<16x128xf32> to vector<16x16xf32>
    %140 = vector.shape_cast %139 : vector<16x16xf32> to vector<2x8x16xf32>
    "tpu.trace_start"() <{level = 10 : i32, message = "bqd,bkd->bqk"}> : () -> ()
    %cst_43 = arith.constant dense<0.000000e+00> : vector<2x8x8xf32>
    %141 = tpu.matmul %136, %138, %cst_43 {dimension_numbers = #tpu.dot_dimension_numbers<[2], [2], [1], [1], [0, 0, 0, 1, 1, 1], [0], [0]>} : vector<2x8x16xf32>, vector<2x8x16xf32>, vector<2x8x8xf32> -> vector<2x8x8xf32>
    "tpu.trace_stop"() : () -> ()
    %cst_44 = arith.constant 0.24999994 : f32
    %142 = vector.broadcast %cst_44 : f32 to vector<2x8x8xf32>
    %143 = arith.mulf %141, %142 : vector<2x8x8xf32>
    %cst_45 = arith.constant dense<0xFF800000> : vector<2x8xf32>
    %144 = vector.multi_reduction <maximumf>, %143, %cst_45 [2] : vector<2x8x8xf32> to vector<2x8xf32>
    %145 = vector.shape_cast %144 : vector<2x8xf32> to vector<2x8x1xf32>
    %146 = vector.broadcast %145 : vector<2x8x1xf32> to vector<2x8x8xf32>
    %147 = arith.subf %143, %146 : vector<2x8x8xf32>
    %148 = math.exp %147 : vector<2x8x8xf32>
    %cst_46 = arith.constant dense<0.000000e+00> : vector<2x8xf32>
    %149 = vector.multi_reduction <add>, %148, %cst_46 [2] : vector<2x8x8xf32> to vector<2x8xf32>
    %150 = vector.shape_cast %149 : vector<2x8xf32> to vector<2x8x1xf32>
    %151 = tpu.reciprocal %150 {approx = true} : vector<2x8x1xf32> -> vector<2x8x1xf32>
    "tpu.trace_start"() <{level = 10 : i32, message = "bqk,bkd->bqd"}> : () -> ()
    %cst_47 = arith.constant dense<0.000000e+00> : vector<2x8x16xf32>
    %152 = tpu.matmul %148, %140, %cst_47 {dimension_numbers = #tpu.dot_dimension_numbers<[2], [1], [1], [2], [0, 0, 0, 1, 1, 2], [0], [0]>} : vector<2x8x8xf32>, vector<2x8x16xf32>, vector<2x8x16xf32> -> vector<2x8x16xf32>
    "tpu.trace_stop"() : () -> ()
    %153 = vector.broadcast %151 : vector<2x8x1xf32> to vector<2x8x16xf32>
    %154 = arith.mulf %152, %153 : vector<2x8x16xf32>
    %155 = vector.shape_cast %154 : vector<2x8x16xf32> to vector<16x16xf32>
    %156 = vector.extract_strided_slice %4 {offsets = [0, 112], sizes = [16, 16], strides = [1, 1]} : vector<16x128xf32> to vector<16x16xf32>
    %157 = vector.shape_cast %156 : vector<16x16xf32> to vector<2x8x16xf32>
    %158 = vector.extract_strided_slice %6 {offsets = [0, 112], sizes = [16, 16], strides = [1, 1]} : vector<16x128xf32> to vector<16x16xf32>
    %159 = vector.shape_cast %158 : vector<16x16xf32> to vector<2x8x16xf32>
    %160 = vector.extract_strided_slice %8 {offsets = [0, 112], sizes = [16, 16], strides = [1, 1]} : vector<16x128xf32> to vector<16x16xf32>
    %161 = vector.shape_cast %160 : vector<16x16xf32> to vector<2x8x16xf32>
    "tpu.trace_start"() <{level = 10 : i32, message = "bqd,bkd->bqk"}> : () -> ()
    %cst_48 = arith.constant dense<0.000000e+00> : vector<2x8x8xf32>
    %162 = tpu.matmul %157, %159, %cst_48 {dimension_numbers = #tpu.dot_dimension_numbers<[2], [2], [1], [1], [0, 0, 0, 1, 1, 1], [0], [0]>} : vector<2x8x16xf32>, vector<2x8x16xf32>, vector<2x8x8xf32> -> vector<2x8x8xf32>
    "tpu.trace_stop"() : () -> ()
    %cst_49 = arith.constant 0.24999994 : f32
    %163 = vector.broadcast %cst_49 : f32 to vector<2x8x8xf32>
    %164 = arith.mulf %162, %163 : vector<2x8x8xf32>
    %cst_50 = arith.constant dense<0xFF800000> : vector<2x8xf32>
    %165 = vector.multi_reduction <maximumf>, %164, %cst_50 [2] : vector<2x8x8xf32> to vector<2x8xf32>
    %166 = vector.shape_cast %165 : vector<2x8xf32> to vector<2x8x1xf32>
    %167 = vector.broadcast %166 : vector<2x8x1xf32> to vector<2x8x8xf32>
    %168 = arith.subf %164, %167 : vector<2x8x8xf32>
    %169 = math.exp %168 : vector<2x8x8xf32>
    %cst_51 = arith.constant dense<0.000000e+00> : vector<2x8xf32>
    %170 = vector.multi_reduction <add>, %169, %cst_51 [2] : vector<2x8x8xf32> to vector<2x8xf32>
    %171 = vector.shape_cast %170 : vector<2x8xf32> to vector<2x8x1xf32>
    %172 = tpu.reciprocal %171 {approx = true} : vector<2x8x1xf32> -> vector<2x8x1xf32>
    "tpu.trace_start"() <{level = 10 : i32, message = "bqk,bkd->bqd"}> : () -> ()
    %cst_52 = arith.constant dense<0.000000e+00> : vector<2x8x16xf32>
    %173 = tpu.matmul %169, %161, %cst_52 {dimension_numbers = #tpu.dot_dimension_numbers<[2], [1], [1], [2], [0, 0, 0, 1, 1, 2], [0], [0]>} : vector<2x8x8xf32>, vector<2x8x16xf32>, vector<2x8x16xf32> -> vector<2x8x16xf32>
    "tpu.trace_stop"() : () -> ()
    %174 = vector.broadcast %172 : vector<2x8x1xf32> to vector<2x8x16xf32>
    %175 = arith.mulf %173, %174 : vector<2x8x16xf32>
    %176 = vector.shape_cast %175 : vector<2x8x16xf32> to vector<16x16xf32>
    %177 = tpu.concatenate %29, %50, %71, %92, %113, %134, %155, %176 in 1 : vector<16x16xf32>, vector<16x16xf32>, vector<16x16xf32>, vector<16x16xf32>, vector<16x16xf32>, vector<16x16xf32>, vector<16x16xf32>, vector<16x16xf32> -> vector<16x128xf32>
    %c0_53 = arith.constant 0 : index
    %c0_54 = arith.constant 0 : index
    %178 = vector.load %arg6[%c0_53, %c0_54] : memref<128x32xf32, #tpu.memory_space<vmem>>, vector<128x32xf32>
    %cst_55 = arith.constant dense<0.000000e+00> : vector<16x32xf32>
    %179 = tpu.matmul %177, %178, %cst_55 {dimension_numbers = #tpu.dot_dimension_numbers<[1], [0], [0], [1], [0, 0, 1, 1], [], []>} : vector<16x128xf32>, vector<128x32xf32>, vector<16x32xf32> -> vector<16x32xf32>
    %180 = arith.addf %0, %179 : vector<16x32xf32>
    %c0_56 = arith.constant 0 : index
    %c0_57 = arith.constant 0 : index
    %181 = vector.load %arg7[%c0_56, %c0_57] : memref<32x32xf32, #tpu.memory_space<vmem>>, vector<32x32xf32>
    %cst_58 = arith.constant dense<0.000000e+00> : vector<16x32xf32>
    %182 = tpu.matmul %180, %181, %cst_58 {dimension_numbers = #tpu.dot_dimension_numbers<[1], [0], [0], [1], [0, 0, 1, 1], [], []>} : vector<16x32xf32>, vector<32x32xf32>, vector<16x32xf32> -> vector<16x32xf32>
    %c0_59 = arith.constant 0 : index
    %c0_60 = arith.constant 0 : index
    %183 = vector.load %arg8[%c0_59, %c0_60] : memref<1x32xf32, #tpu.memory_space<vmem>>, vector<1x32xf32>
    %184 = vector.broadcast %183 : vector<1x32xf32> to vector<16x32xf32>
    %185 = arith.addf %182, %184 : vector<16x32xf32>
    %cst_61 = arith.constant 0.000000e+00 : f32
    %186 = vector.broadcast %cst_61 : f32 to vector<16x32xf32>
    %187 = arith.maximumf %185, %186 : vector<16x32xf32>
    %c0_62 = arith.constant 0 : index
    %c0_63 = arith.constant 0 : index
    %188 = vector.load %arg9[%c0_62, %c0_63] : memref<32x32xf32, #tpu.memory_space<vmem>>, vector<32x32xf32>
    %cst_64 = arith.constant dense<0.000000e+00> : vector<16x32xf32>
    %189 = tpu.matmul %187, %188, %cst_64 {dimension_numbers = #tpu.dot_dimension_numbers<[1], [0], [0], [1], [0, 0, 1, 1], [], []>} : vector<16x32xf32>, vector<32x32xf32>, vector<16x32xf32> -> vector<16x32xf32>
    %c0_65 = arith.constant 0 : index
    %c0_66 = arith.constant 0 : index
    %190 = vector.load %arg10[%c0_65, %c0_66] : memref<1x32xf32, #tpu.memory_space<vmem>>, vector<1x32xf32>
    %191 = vector.broadcast %190 : vector<1x32xf32> to vector<16x32xf32>
    %192 = arith.addf %189, %191 : vector<16x32xf32>
    %193 = arith.addf %192, %180 : vector<16x32xf32>
    %c0_67 = arith.constant 0 : index
    %c0_68 = arith.constant 0 : index
    %194 = vector.load %arg11[%c0_67, %c0_68] : memref<16x32xf32, #tpu.memory_space<vmem>>, vector<16x32xf32>
    tpu.vector_store %arg11[%c0_67, %c0_68], %193 {strides = array<i32>} : memref<16x32xf32, #tpu.memory_space<vmem>>, vector<16x32xf32>,
    return
  }
}

</mosaic_0001>

<llo_original>
// kernel: tpu_custom_call.1
$region0: #{tpu_custom_call.1}
  #allocation0 [shape = 'u32[]', space=smem, size = 0x4, offset = 0x4, fixed_abs, tag = 'smem constant byte address 0x4 - core index']
  #allocation1 [shape = 'u32[72,128]{1,0:T(1,128)}', space=vmem, size = 0x9000, scoped, tag = 'internal scratch']
  %s0 = inlined_call_operand.hbm [shape: f32[16,32], index: 0, kind: input, shape index: {}]
  %s1 = inlined_call_operand.hbm [shape: f32[16,32], index: 1, kind: input, shape index: {}]
  %s2 = inlined_call_operand.hbm [shape: f32[16,32], index: 2, kind: input, shape index: {}]
  %s3 = inlined_call_operand.vmem [shape: f32[32,128], index: 3, kind: input, shape index: {}]
  %s4 = inlined_call_operand.vmem [shape: f32[32,128], index: 4, kind: input, shape index: {}]
  %s5 = inlined_call_operand.vmem [shape: f32[32,128], index: 5, kind: input, shape index: {}]
  %s6 = inlined_call_operand.vmem [shape: f32[128,32], index: 6, kind: input, shape index: {}]
  %s7 = inlined_call_operand.vmem [shape: f32[32,32], index: 7, kind: input, shape index: {}]
  %s8 = inlined_call_operand.vmem [shape: f32[1,32], index: 8, kind: input, shape index: {}]
  %s9 = inlined_call_operand.vmem [shape: f32[32,32], index: 9, kind: input, shape index: {}]
  %s10 = inlined_call_operand.vmem [shape: f32[1,32], index: 10, kind: input, shape index: {}]
  %s11 = inlined_call_operand.hbm [shape: f32[16,32], index: 11, kind: output, shape index: {}]
  %s12 = sld [smem:[#allocation0]]
  $region66: #{tpu_custom_call.1} parent=0
    _
  %s14 = ssub.s32 1, %s12
  %s15 = scalar_select 0, %s14, %s12
  $region1: #{tpu_custom_call.1} parent=0
    #allocation2 [shape = 'u8[8192]{0}', space=vmem, size = 0x2000, scoped, tag = 'input window, operand 0, single buffered']
    #allocation3 [shape = 's32[1]{0}', space=sflag, size = 0x4, scoped, tag = 'scoped memory for tpu_custom_call.1']
    #allocation4 [shape = 's32[1]{0}', space=sflag, size = 0x4, scoped, tag = 'scoped memory for tpu_custom_call.1']
    #allocation5 [shape = 'u8[8192]{0}', space=vmem, size = 0x2000, scoped, tag = 'input window, operand 1, single buffered']
    #allocation6 [shape = 's32[1]{0}', space=sflag, size = 0x4, scoped, tag = 'scoped memory for tpu_custom_call.1']
    #allocation7 [shape = 'u8[8192]{0}', space=vmem, size = 0x2000, scoped, tag = 'input window, operand 2, single buffered']
    #allocation8 [shape = 'u8[8192]{0}', space=vmem, size = 0x2000, scoped, tag = 'output window, operand 0, single buffered']
    %16 = vsyncpa [#allocation3], 0
    %17 = vsyncpa [#allocation6], 0
    %18 = vsyncpa [#allocation4], 0
    // Predicated region
    $region2: #{tpu_custom_call.1} parent=1 // pred_check
      _
    $region3: #{tpu_custom_call.1} parent=1 // pred_check_branch
      %20 = sbr.rel (0) target = $region5
    $region4: #{tpu_custom_call.1} parent=1 // pred_region
      %22 = vsyncadd [#allocation3], 0
      %s23 = sshll.u32 %s0, 4
      %s24 = int_to_ptr.hbm [resolvable:$true] %s23
      %s25 = sshll.u32 [#allocation2], 4
      %s26 = int_to_ptr.vmem [resolvable:$true] %s25
      %31 = dma.hbm_to_vmem [thread:$0]  %s24, 256, %s26, [#allocation3], 128, 128, 8
    $region5: #{tpu_custom_call.1} parent=1 // pred_fallthru
      _
    // Predicated region
    $region6: #{tpu_custom_call.1} parent=1 // pred_check
      _
    $region7: #{tpu_custom_call.1} parent=1 // pred_check_branch
      %33 = sbr.rel (0) target = $region9
    $region8: #{tpu_custom_call.1} parent=1 // pred_region
      %35 = vsyncadd [#allocation6], 0
      %s36 = sshll.u32 %s1, 4
      %s37 = int_to_ptr.hbm [resolvable:$true] %s36
      %s38 = sshll.u32 [#allocation5], 4
      %s39 = int_to_ptr.vmem [resolvable:$true] %s38
      %44 = dma.hbm_to_vmem [thread:$0]  %s37, 256, %s39, [#allocation6], 128, 128, 8
    $region9: #{tpu_custom_call.1} parent=1 // pred_fallthru
      _
    // Predicated region
    $region10: #{tpu_custom_call.1} parent=1 // pred_check
      _
    $region11: #{tpu_custom_call.1} parent=1 // pred_check_branch
      %46 = sbr.rel (0) target = $region13
    $region12: #{tpu_custom_call.1} parent=1 // pred_region
      %48 = vsyncadd [#allocation6], 0
      %s49 = sshll.u32 %s2, 4
      %s50 = int_to_ptr.hbm [resolvable:$true] %s49
      %s51 = sshll.u32 [#allocation7], 4
      %s52 = int_to_ptr.vmem [resolvable:$true] %s51
      %57 = dma.hbm_to_vmem [thread:$0]  %s50, 256, %s52, [#allocation6], 128, 128, 8
    $region13: #{tpu_custom_call.1} parent=1 // pred_fallthru
      _
    // Predicated region
    $region14: #{tpu_custom_call.1} parent=1 // pred_check
      _
    $region15: #{tpu_custom_call.1} parent=1 // pred_check_branch
      %59 = sbr.rel (0) target = $region17
    $region16: #{tpu_custom_call.1} parent=1 // pred_region
      _
    $region17: #{tpu_custom_call.1} parent=1 // pred_fallthru
      _
    // Predicated region
    $region18: #{tpu_custom_call.1} parent=1 // pred_check
      _
    $region19: #{tpu_custom_call.1} parent=1 // pred_check_branch
      %61 = sbr.rel (0) target = $region21
    $region20: #{tpu_custom_call.1} parent=1 // pred_region
      _
    $region21: #{tpu_custom_call.1} parent=1 // pred_fallthru
      _
    // Predicated region
    $region22: #{tpu_custom_call.1} parent=1 // pred_check
      _
    $region23: #{tpu_custom_call.1} parent=1 // pred_check_branch
      %63 = sbr.rel (0) target = $region25
    $region24: #{tpu_custom_call.1} parent=1 // pred_region
      _
    $region25: #{tpu_custom_call.1} parent=1 // pred_fallthru
      _
    // Predicated region
    $region26: #{tpu_custom_call.1} parent=1 // pred_check
      _
    $region27: #{tpu_custom_call.1} parent=1 // pred_check_branch
      %65 = sbr.rel (0) target = $region29
    $region28: #{tpu_custom_call.1} parent=1 // pred_region
      _
    $region29: #{tpu_custom_call.1} parent=1 // pred_fallthru
      _
    // Predicated region
    $region30: #{tpu_custom_call.1} parent=1 // pred_check
      _
    $region31: #{tpu_custom_call.1} parent=1 // pred_check_branch
      %67 = sbr.rel (0) target = $region33
    $region32: #{tpu_custom_call.1} parent=1 // pred_region
      _
    $region33: #{tpu_custom_call.1} parent=1 // pred_fallthru
      _
    // Predicated region
    $region34: #{tpu_custom_call.1} parent=1 // pred_check
      _
    $region35: #{tpu_custom_call.1} parent=1 // pred_check_branch
      %69 = sbr.rel (0) target = $region37
    $region36: #{tpu_custom_call.1} parent=1 // pred_region
      _
    $region37: #{tpu_custom_call.1} parent=1 // pred_fallthru
      _
    // Predicated region
    $region38: #{tpu_custom_call.1} parent=1 // pred_check
      _
    $region39: #{tpu_custom_call.1} parent=1 // pred_check_branch
      %71 = sbr.rel (0) target = $region41
    $region40: #{tpu_custom_call.1} parent=1 // pred_region
      _
    $region41: #{tpu_custom_call.1} parent=1 // pred_fallthru
      _
    // Predicated region
    $region42: #{tpu_custom_call.1} parent=1 // pred_check
      _
    $region43: #{tpu_custom_call.1} parent=1 // pred_check_branch
      %73 = sbr.rel (0) target = $region45
    $region44: #{tpu_custom_call.1} parent=1 // pred_region
      _
    $region45: #{tpu_custom_call.1} parent=1 // pred_fallthru
      _
    // Predicated region
    $region46: #{tpu_custom_call.1} parent=1 // pred_check
      _
    $region47: #{tpu_custom_call.1} parent=1 // pred_check_branch
      %75 = sbr.rel (0) target = $region49
    $region48: #{tpu_custom_call.1} parent=1 // pred_region
      %77 = dma.done [#allocation3], 256
    $region49: #{tpu_custom_call.1} parent=1 // pred_fallthru
      _
    // Predicated region
    $region50: #{tpu_custom_call.1} parent=1 // pred_check
      _
    $region51: #{tpu_custom_call.1} parent=1 // pred_check_branch
      %79 = sbr.rel (0) target = $region53
    $region52: #{tpu_custom_call.1} parent=1 // pred_region
      %81 = dma.done [#allocation6], 256
    $region53: #{tpu_custom_call.1} parent=1 // pred_fallthru
      _
    // Predicated region
    $region54: #{tpu_custom_call.1} parent=1 // pred_check
      _
    $region55: #{tpu_custom_call.1} parent=1 // pred_check_branch
      %83 = sbr.rel (0) target = $region57
    $region56: #{tpu_custom_call.1} parent=1 // pred_region
      %85 = dma.done [#allocation6], 256
    $region57: #{tpu_custom_call.1} parent=1 // pred_fallthru
      _
    %v86 = vld [vmem:[#allocation2] sm:$0xff]
    %v87 = vld [vmem:[#allocation2 + $0x8] sm:$0xff]
    %v88 = vld [vmem:[#allocation5] sm:$0xff]
    %v89 = vld [vmem:[#allocation5 + $0x8] sm:$0xff]
    %v90 = vld [vmem:[#allocation7] sm:$0xff]
    %v91 = vld [vmem:[#allocation7 + $0x8] sm:$0xff]
    %v92 = vld [vmem:[%s3] sm:$0xff]
    %v93 = vld [vmem:[%s3 + $0x8] sm:$0xff]
    %v94 = vld [vmem:[%s3 + $0x10] sm:$0xff]
    %v95 = vld [vmem:[%s3 + $0x18] sm:$0xff]
    %vm96 = vcmask 261120
    %v98 = vsel %vm96, %v86, 0
    %v101 = vsel %vm96, %v87, 0
    %103 = vmatpush.msra.mxu0 0.0
    %104 = vmatpush.msra.mxu0 0.0
    %105 = vmatpush.msra.mxu0 0.0
    %106 = vmatpush.msra.mxu0 0.0
    %107 = vmatpush.msra.mxu0 0.0
    %108 = vmatpush.msra.mxu0 0.0
    %109 = vmatpush.msra.mxu0 0.0
    %110 = vmatpush.msra.mxu0 0.0
    %111 = vmatpush.msra.mxu0 0.0
    %112 = vmatpush.msra.mxu0 0.0
    %113 = vmatpush.msra.mxu0 0.0
    %114 = vmatpush.msra.mxu0 0.0
    %115 = vmatpush.msra.mxu0 %v95
    %116 = vmatpush.msra.mxu0 %v94
    %117 = vmatpush.msra.mxu0 %v93
    %118 = vmatpush.msra.mxu0 %v92
    %119 = vmatmul.f32.gmra.mxu0 %v98
    %v120 = vpop.f32.mrf.mxu0
    %v121 = vadd.f32 0.0, %v120
    %122 = vmatmul.f32.gmra.mxu0 %v101
    %v123 = vpop.f32.mrf.mxu0
    %v124 = vadd.f32 0.0, %v123
    %125 = vdwg.mxu0
    %v126 = vld [vmem:[%s4] sm:$0xff]
    %v127 = vld [vmem:[%s4 + $0x8] sm:$0xff]
    %v128 = vld [vmem:[%s4 + $0x10] sm:$0xff]
    %v129 = vld [vmem:[%s4 + $0x18] sm:$0xff]
    %v131 = vsel %vm96, %v88, 0
    %v134 = vsel %vm96, %v89, 0
    %136 = vmatpush.msra.mxu0 0.0
    %137 = vmatpush.msra.mxu0 0.0
    %138 = vmatpush.msra.mxu0 0.0
    %139 = vmatpush.msra.mxu0 0.0
    %140 = vmatpush.msra.mxu0 0.0
    %141 = vmatpush.msra.mxu0 0.0
    %142 = vmatpush.msra.mxu0 0.0
    %143 = vmatpush.msra.mxu0 0.0
    %144 = vmatpush.msra.mxu0 0.0
    %145 = vmatpush.msra.mxu0 0.0
    %146 = vmatpush.msra.mxu0 0.0
    %147 = vmatpush.msra.mxu0 0.0
    %148 = vmatpush.msra.mxu0 %v129
    %149 = vmatpush.msra.mxu0 %v128
    %150 = vmatpush.msra.mxu0 %v127
    %151 = vmatpush.msra.mxu0 %v126
    %152 = vmatmul.f32.gmra.mxu0 %v131
    %v153 = vpop.f32.mrf.mxu0
    %v154 = vadd.f32 0.0, %v153
    %155 = vmatmul.f32.gmra.mxu0 %v134
    %v156 = vpop.f32.mrf.mxu0
    %v157 = vadd.f32 0.0, %v156
    %158 = vdwg.mxu0
    %v159 = vld [vmem:[%s5] sm:$0xff]
    %v160 = vld [vmem:[%s5 + $0x8] sm:$0xff]
    %v161 = vld [vmem:[%s5 + $0x10] sm:$0xff]
    %v162 = vld [vmem:[%s5 + $0x18] sm:$0xff]
    %v164 = vsel %vm96, %v90, 0
    %v167 = vsel %vm96, %v91, 0
    %169 = vmatpush.msra.mxu0 0.0
    %170 = vmatpush.msra.mxu0 0.0
    %171 = vmatpush.msra.mxu0 0.0
    %172 = vmatpush.msra.mxu0 0.0
    %173 = vmatpush.msra.mxu0 0.0
    %174 = vmatpush.msra.mxu0 0.0
    %175 = vmatpush.msra.mxu0 0.0
    %176 = vmatpush.msra.mxu0 0.0
    %177 = vmatpush.msra.mxu0 0.0
    %178 = vmatpush.msra.mxu0 0.0
    %179 = vmatpush.msra.mxu0 0.0
    %180 = vmatpush.msra.mxu0 0.0
    %181 = vmatpush.msra.mxu0 %v162
    %182 = vmatpush.msra.mxu0 %v161
    %183 = vmatpush.msra.mxu0 %v160
    %184 = vmatpush.msra.mxu0 %v159
    %185 = vmatmul.f32.gmra.mxu0 %v164
    %v186 = vpop.f32.mrf.mxu0
    %v187 = vadd.f32 0.0, %v186
    %188 = vmatmul.f32.gmra.mxu0 %v167
    %v189 = vpop.f32.mrf.mxu0
    %v190 = vadd.f32 0.0, %v189
    %191 = vdwg.mxu0
    %vm192 = vcmask 130048
    %v194 = vsel %vm192, %v121, 0
    %v197 = vsel %vm192, %v154, 0
    %199 = vmatpush.xpose.msra.mxu0 0.0
    %200 = vmatpush.xpose.msra.mxu0 0.0
    %201 = vmatpush.xpose.msra.mxu0 0.0
    %202 = vmatpush.xpose.msra.mxu0 0.0
    %203 = vmatpush.xpose.msra.mxu0 0.0
    %204 = vmatpush.xpose.msra.mxu0 0.0
    %205 = vmatpush.xpose.msra.mxu0 0.0
    %206 = vmatpush.xpose.msra.mxu0 0.0
    %207 = vmatpush.xpose.msra.mxu0 0.0
    %208 = vmatpush.xpose.msra.mxu0 0.0
    %209 = vmatpush.xpose.msra.mxu0 0.0
    %210 = vmatpush.xpose.msra.mxu0 0.0
    %211 = vmatpush.xpose.msra.mxu0 0.0
    %212 = vmatpush.xpose.msra.mxu0 0.0
    %213 = vmatpush.xpose.msra.mxu0 0.0
    %214 = vmatpush.xpose.msra.mxu0 %v197
    %215 = vmatmul.f32.gmra.mxu0 %v194
    %v216 = vpop.f32.mrf.mxu0
    %v217 = vadd.f32 0.0, %v216
    %218 = vdwg.mxu0
    %v220 = vsel %vm192, %v124, 0
    %v223 = vsel %vm192, %v157, 0
    %225 = vmatpush.xpose.msra.mxu0 0.0
    %226 = vmatpush.xpose.msra.mxu0 0.0
    %227 = vmatpush.xpose.msra.mxu0 0.0
    %228 = vmatpush.xpose.msra.mxu0 0.0
    %229 = vmatpush.xpose.msra.mxu0 0.0
    %230 = vmatpush.xpose.msra.mxu0 0.0
    %231 = vmatpush.xpose.msra.mxu0 0.0
    %232 = vmatpush.xpose.msra.mxu0 0.0
    %233 = vmatpush.xpose.msra.mxu0 0.0
    %234 = vmatpush.xpose.msra.mxu0 0.0
    %235 = vmatpush.xpose.msra.mxu0 0.0
    %236 = vmatpush.xpose.msra.mxu0 0.0
    %237 = vmatpush.xpose.msra.mxu0 0.0
    %238 = vmatpush.xpose.msra.mxu0 0.0
    %239 = vmatpush.xpose.msra.mxu0 0.0
    %240 = vmatpush.xpose.msra.mxu0 %v223
    %241 = vmatmul.f32.gmra.mxu0 %v220
    %v242 = vpop.f32.mrf.mxu0
    %v243 = vadd.f32 0.0, %v242
    %244 = vdwg.mxu0
    %v245 = vmul.f32 %v217, 0.24999994
    %v246 = vmul.f32 %v243, 0.24999994
    %vm247 = vcmask 64512
    %v248 = vsel %vm247, %v245, -inf
    %249 = vmax.xlane.f32.xlu0 %v248
    %v250 = vpop.xlane.xlu0 %249
    %v251 = vsel %vm247, %v246, -inf
    %252 = vmax.xlane.f32.xlu0 %v251
    %v253 = vpop.xlane.xlu0 %252
    %v254 = vsub.f32 %v245, %v250
    %v255 = vsub.f32 %v246, %v253
    %v256 = vmul.f32 %v254, 1.442695
    %v257 = vpow.pop %v256
    %v258 = vmul.f32 %v255, 1.442695
    %v259 = vpow.pop %v258
    %v260 = vsel %vm247, %v257, 0.0
    %261 = vadd.xlane.f32.xlu0 %v260
    %v262 = vpop.xlane.xlu0 %261
    %v263 = vsel %vm247, %v259, 0.0
    %264 = vadd.xlane.f32.xlu0 %v263
    %v265 = vpop.xlane.xlu0 %264
    %v266 = vrcp.pop %v262
    %v267 = vrcp.pop %v265
    %v269 = vsel %vm247, %v257, 0
    %271 = vmatpush.msra.mxu0 0.0
    %272 = vmatpush.msra.mxu0 0.0
    %273 = vmatpush.msra.mxu0 0.0
    %274 = vmatpush.msra.mxu0 0.0
    %275 = vmatpush.msra.mxu0 0.0
    %276 = vmatpush.msra.mxu0 0.0
    %277 = vmatpush.msra.mxu0 0.0
    %278 = vmatpush.msra.mxu0 0.0
    %279 = vmatpush.msra.mxu0 0.0
    %280 = vmatpush.msra.mxu0 0.0
    %281 = vmatpush.msra.mxu0 0.0
    %282 = vmatpush.msra.mxu0 0.0
    %283 = vmatpush.msra.mxu0 0.0
    %284 = vmatpush.msra.mxu0 0.0
    %285 = vmatpush.msra.mxu0 0.0
    %286 = vmatpush.msra.mxu0 %v187
    %287 = vmatmul.f32.gmra.mxu0 %v269
    %v288 = vpop.f32.mrf.mxu0
    %v289 = vadd.f32 0.0, %v288
    %290 = vdwg.mxu0
    %v292 = vsel %vm247, %v259, 0
    %294 = vmatpush.msra.mxu0 0.0
    %295 = vmatpush.msra.mxu0 0.0
    %296 = vmatpush.msra.mxu0 0.0
    %297 = vmatpush.msra.mxu0 0.0
    %298 = vmatpush.msra.mxu0 0.0
    %299 = vmatpush.msra.mxu0 0.0
    %300 = vmatpush.msra.mxu0 0.0
    %301 = vmatpush.msra.mxu0 0.0
    %302 = vmatpush.msra.mxu0 0.0
    %303 = vmatpush.msra.mxu0 0.0
    %304 = vmatpush.msra.mxu0 0.0
    %305 = vmatpush.msra.mxu0 0.0
    %306 = vmatpush.msra.mxu0 0.0
    %307 = vmatpush.msra.mxu0 0.0
    %308 = vmatpush.msra.mxu0 0.0
    %309 = vmatpush.msra.mxu0 %v190
    %310 = vmatmul.f32.gmra.mxu0 %v292
    %v311 = vpop.f32.mrf.mxu0
    %v312 = vadd.f32 0.0, %v311
    %313 = vdwg.mxu0
    %v314 = vmul.f32 %v289, %v266
    %v315 = vmul.f32 %v312, %v267
    %316 = vrot.lane.b32.xlu0 %v121, 112
    %v317 = vpop.permute.xlu0 %316
    %318 = vrot.lane.b32.xlu0 %v154, 112
    %v319 = vpop.permute.xlu0 %318
    %v320 = vsel %vm192, %v317, 0
    %v322 = vsel %vm192, %v319, 0
    %324 = vmatpush.xpose.msra.mxu0 0.0
    %325 = vmatpush.xpose.msra.mxu0 0.0
    %326 = vmatpush.xpose.msra.mxu0 0.0
    %327 = vmatpush.xpose.msra.mxu0 0.0
    %328 = vmatpush.xpose.msra.mxu0 0.0
    %329 = vmatpush.xpose.msra.mxu0 0.0
    %330 = vmatpush.xpose.msra.mxu0 0.0
    %331 = vmatpush.xpose.msra.mxu0 0.0
    %332 = vmatpush.xpose.msra.mxu0 0.0
    %333 = vmatpush.xpose.msra.mxu0 0.0
    %334 = vmatpush.xpose.msra.mxu0 0.0
    %335 = vmatpush.xpose.msra.mxu0 0.0
    %336 = vmatpush.xpose.msra.mxu0 0.0
    %337 = vmatpush.xpose.msra.mxu0 0.0
    %338 = vmatpush.xpose.msra.mxu0 0.0
    %339 = vmatpush.xpose.msra.mxu0 %v322
    %340 = vmatmul.f32.gmra.mxu0 %v320
    %v341 = vpop.f32.mrf.mxu0
    %v342 = vadd.f32 0.0, %v341
    %343 = vdwg.mxu0
    %344 = vrot.lane.b32.xlu0 %v124, 112
    %v345 = vpop.permute.xlu0 %344
    %346 = vrot.lane.b32.xlu0 %v157, 112
    %v347 = vpop.permute.xlu0 %346
    %v348 = vsel %vm192, %v345, 0
    %v350 = vsel %vm192, %v347, 0
    %352 = vmatpush.xpose.msra.mxu0 0.0
    %353 = vmatpush.xpose.msra.mxu0 0.0
    %354 = vmatpush.xpose.msra.mxu0 0.0
    %355 = vmatpush.xpose.msra.mxu0 0.0
    %356 = vmatpush.xpose.msra.mxu0 0.0
    %357 = vmatpush.xpose.msra.mxu0 0.0
    %358 = vmatpush.xpose.msra.mxu0 0.0
    %359 = vmatpush.xpose.msra.mxu0 0.0
    %360 = vmatpush.xpose.msra.mxu0 0.0
    %361 = vmatpush.xpose.msra.mxu0 0.0
    %362 = vmatpush.xpose.msra.mxu0 0.0
    %363 = vmatpush.xpose.msra.mxu0 0.0
    %364 = vmatpush.xpose.msra.mxu0 0.0
    %365 = vmatpush.xpose.msra.mxu0 0.0
    %366 = vmatpush.xpose.msra.mxu0 0.0
    %367 = vmatpush.xpose.msra.mxu0 %v350
    %368 = vmatmul.f32.gmra.mxu0 %v348
    %v369 = vpop.f32.mrf.mxu0
    %v370 = vadd.f32 0.0, %v369
    %371 = vdwg.mxu0
    %v372 = vmul.f32 %v342, 0.24999994
    %v373 = vmul.f32 %v370, 0.24999994
    %v374 = vsel %vm247, %v372, -inf
    %375 = vmax.xlane.f32.xlu0 %v374
    %v376 = vpop.xlane.xlu0 %375
    %v377 = vsel %vm247, %v373, -inf
    %378 = vmax.xlane.f32.xlu0 %v377
    %v379 = vpop.xlane.xlu0 %378
    %v380 = vsub.f32 %v372, %v376
    %v381 = vsub.f32 %v373, %v379
    %v382 = vmul.f32 %v380, 1.442695
    %v383 = vpow.pop %v382
    %v384 = vmul.f32 %v381, 1.442695
    %v385 = vpow.pop %v384
    %v386 = vsel %vm247, %v383, 0.0
    %387 = vadd.xlane.f32.xlu0 %v386
    %v388 = vpop.xlane.xlu0 %387
    %v389 = vsel %vm247, %v385, 0.0
    %390 = vadd.xlane.f32.xlu0 %v389
    %v391 = vpop.xlane.xlu0 %390
    %v392 = vrcp.pop %v388
    %v393 = vrcp.pop %v391
    %395 = vrot.lane.b32.xlu0 %v187, 112
    %v396 = vpop.permute.xlu0 %395
    %v399 = vsel %vm247, %v383, 0
    %401 = vmatpush.msra.mxu0 0.0
    %402 = vmatpush.msra.mxu0 0.0
    %403 = vmatpush.msra.mxu0 0.0
    %404 = vmatpush.msra.mxu0 0.0
    %405 = vmatpush.msra.mxu0 0.0
    %406 = vmatpush.msra.mxu0 0.0
    %407 = vmatpush.msra.mxu0 0.0
    %408 = vmatpush.msra.mxu0 0.0
    %409 = vmatpush.msra.mxu0 0.0
    %410 = vmatpush.msra.mxu0 0.0
    %411 = vmatpush.msra.mxu0 0.0
    %412 = vmatpush.msra.mxu0 0.0
    %413 = vmatpush.msra.mxu0 0.0
    %414 = vmatpush.msra.mxu0 0.0
    %415 = vmatpush.msra.mxu0 0.0
    %416 = vmatpush.msra.mxu0 %v396
    %417 = vmatmul.f32.gmra.mxu0 %v399
    %v418 = vpop.f32.mrf.mxu0
    %v419 = vadd.f32 0.0, %v418
    %420 = vdwg.mxu0
    %422 = vrot.lane.b32.xlu0 %v190, 112
    %v423 = vpop.permute.xlu0 %422
    %v426 = vsel %vm247, %v385, 0
    %428 = vmatpush.msra.mxu0 0.0
    %429 = vmatpush.msra.mxu0 0.0
    %430 = vmatpush.msra.mxu0 0.0
    %431 = vmatpush.msra.mxu0 0.0
    %432 = vmatpush.msra.mxu0 0.0
    %433 = vmatpush.msra.mxu0 0.0
    %434 = vmatpush.msra.mxu0 0.0
    %435 = vmatpush.msra.mxu0 0.0
    %436 = vmatpush.msra.mxu0 0.0
    %437 = vmatpush.msra.mxu0 0.0
    %438 = vmatpush.msra.mxu0 0.0
    %439 = vmatpush.msra.mxu0 0.0
    %440 = vmatpush.msra.mxu0 0.0
    %441 = vmatpush.msra.mxu0 0.0
    %442 = vmatpush.msra.mxu0 0.0
    %443 = vmatpush.msra.mxu0 %v423
    %444 = vmatmul.f32.gmra.mxu0 %v426
    %v445 = vpop.f32.mrf.mxu0
    %v446 = vadd.f32 0.0, %v445
    %447 = vdwg.mxu0
    %v448 = vmul.f32 %v419, %v392
    %v449 = vmul.f32 %v446, %v393
    %450 = vrot.lane.b32.xlu0 %v121, 96
    %v451 = vpop.permute.xlu0 %450
    %452 = vrot.lane.b32.xlu0 %v154, 96
    %v453 = vpop.permute.xlu0 %452
    %v454 = vsel %vm192, %v451, 0
    %v456 = vsel %vm192, %v453, 0
    %458 = vmatpush.xpose.msra.mxu0 0.0
    %459 = vmatpush.xpose.msra.mxu0 0.0
    %460 = vmatpush.xpose.msra.mxu0 0.0
    %461 = vmatpush.xpose.msra.mxu0 0.0
    %462 = vmatpush.xpose.msra.mxu0 0.0
    %463 = vmatpush.xpose.msra.mxu0 0.0
    %464 = vmatpush.xpose.msra.mxu0 0.0
    %465 = vmatpush.xpose.msra.mxu0 0.0
    %466 = vmatpush.xpose.msra.mxu0 0.0
    %467 = vmatpush.xpose.msra.mxu0 0.0
    %468 = vmatpush.xpose.msra.mxu0 0.0
    %469 = vmatpush.xpose.msra.mxu0 0.0
    %470 = vmatpush.xpose.msra.mxu0 0.0
    %471 = vmatpush.xpose.msra.mxu0 0.0
    %472 = vmatpush.xpose.msra.mxu0 0.0
    %473 = vmatpush.xpose.msra.mxu0 %v456
    %474 = vmatmul.f32.gmra.mxu0 %v454
    %v475 = vpop.f32.mrf.mxu0
    %v476 = vadd.f32 0.0, %v475
    %477 = vdwg.mxu0
    %478 = vrot.lane.b32.xlu0 %v124, 96
    %v479 = vpop.permute.xlu0 %478
    %480 = vrot.lane.b32.xlu0 %v157, 96
    %v481 = vpop.permute.xlu0 %480
    %v482 = vsel %vm192, %v479, 0
    %v484 = vsel %vm192, %v481, 0
    %486 = vmatpush.xpose.msra.mxu0 0.0
    %487 = vmatpush.xpose.msra.mxu0 0.0
    %488 = vmatpush.xpose.msra.mxu0 0.0
    %489 = vmatpush.xpose.msra.mxu0 0.0
    %490 = vmatpush.xpose.msra.mxu0 0.0
    %491 = vmatpush.xpose.msra.mxu0 0.0
    %492 = vmatpush.xpose.msra.mxu0 0.0
    %493 = vmatpush.xpose.msra.mxu0 0.0
    %494 = vmatpush.xpose.msra.mxu0 0.0
    %495 = vmatpush.xpose.msra.mxu0 0.0
    %496 = vmatpush.xpose.msra.mxu0 0.0
    %497 = vmatpush.xpose.msra.mxu0 0.0
    %498 = vmatpush.xpose.msra.mxu0 0.0
    %499 = vmatpush.xpose.msra.mxu0 0.0
    %500 = vmatpush.xpose.msra.mxu0 0.0
    %501 = vmatpush.xpose.msra.mxu0 %v484
    %502 = vmatmul.f32.gmra.mxu0 %v482
    %v503 = vpop.f32.mrf.mxu0
    %v504 = vadd.f32 0.0, %v503
    %505 = vdwg.mxu0
    %v506 = vmul.f32 %v476, 0.24999994
    %v507 = vmul.f32 %v504, 0.24999994
    %v508 = vsel %vm247, %v506, -inf
    %509 = vmax.xlane.f32.xlu0 %v508
    %v510 = vpop.xlane.xlu0 %509
    %v511 = vsel %vm247, %v507, -inf
    %512 = vmax.xlane.f32.xlu0 %v511
    %v513 = vpop.xlane.xlu0 %512
    %v514 = vsub.f32 %v506, %v510
    %v515 = vsub.f32 %v507, %v513
    %v516 = vmul.f32 %v514, 1.442695
    %v517 = vpow.pop %v516
    %v518 = vmul.f32 %v515, 1.442695
    %v519 = vpow.pop %v518
    %v520 = vsel %vm247, %v517, 0.0
    %521 = vadd.xlane.f32.xlu0 %v520
    %v522 = vpop.xlane.xlu0 %521
    %v523 = vsel %vm247, %v519, 0.0
    %524 = vadd.xlane.f32.xlu0 %v523
    %v525 = vpop.xlane.xlu0 %524
    %v526 = vrcp.pop %v522
    %v527 = vrcp.pop %v525
    %528 = vrot.lane.b32.xlu0 %v187, 96
    %v529 = vpop.permute.xlu0 %528
    %v532 = vsel %vm247, %v517, 0
    %534 = vmatpush.msra.mxu0 0.0
    %535 = vmatpush.msra.mxu0 0.0
    %536 = vmatpush.msra.mxu0 0.0
    %537 = vmatpush.msra.mxu0 0.0
    %538 = vmatpush.msra.mxu0 0.0
    %539 = vmatpush.msra.mxu0 0.0
    %540 = vmatpush.msra.mxu0 0.0
    %541 = vmatpush.msra.mxu0 0.0
    %542 = vmatpush.msra.mxu0 0.0
    %543 = vmatpush.msra.mxu0 0.0
    %544 = vmatpush.msra.mxu0 0.0
    %545 = vmatpush.msra.mxu0 0.0
    %546 = vmatpush.msra.mxu0 0.0
    %547 = vmatpush.msra.mxu0 0.0
    %548 = vmatpush.msra.mxu0 0.0
    %549 = vmatpush.msra.mxu0 %v529
    %550 = vmatmul.f32.gmra.mxu0 %v532
    %v551 = vpop.f32.mrf.mxu0
    %v552 = vadd.f32 0.0, %v551
    %553 = vdwg.mxu0
    %554 = vrot.lane.b32.xlu0 %v190, 96
    %v555 = vpop.permute.xlu0 %554
    %v558 = vsel %vm247, %v519, 0
    %560 = vmatpush.msra.mxu0 0.0
    %561 = vmatpush.msra.mxu0 0.0
    %562 = vmatpush.msra.mxu0 0.0
    %563 = vmatpush.msra.mxu0 0.0
    %564 = vmatpush.msra.mxu0 0.0
    %565 = vmatpush.msra.mxu0 0.0
    %566 = vmatpush.msra.mxu0 0.0
    %567 = vmatpush.msra.mxu0 0.0
    %568 = vmatpush.msra.mxu0 0.0
    %569 = vmatpush.msra.mxu0 0.0
    %570 = vmatpush.msra.mxu0 0.0
    %571 = vmatpush.msra.mxu0 0.0
    %572 = vmatpush.msra.mxu0 0.0
    %573 = vmatpush.msra.mxu0 0.0
    %574 = vmatpush.msra.mxu0 0.0
    %575 = vmatpush.msra.mxu0 %v555
    %576 = vmatmul.f32.gmra.mxu0 %v558
    %v577 = vpop.f32.mrf.mxu0
    %v578 = vadd.f32 0.0, %v577
    %579 = vdwg.mxu0
    %v580 = vmul.f32 %v552, %v526
    %v581 = vmul.f32 %v578, %v527
    %582 = vrot.lane.b32.xlu0 %v121, 80
    %v583 = vpop.permute.xlu0 %582
    %584 = vrot.lane.b32.xlu0 %v154, 80
    %v585 = vpop.permute.xlu0 %584
    %v586 = vsel %vm192, %v583, 0
    %v588 = vsel %vm192, %v585, 0
    %590 = vmatpush.xpose.msra.mxu0 0.0
    %591 = vmatpush.xpose.msra.mxu0 0.0
    %592 = vmatpush.xpose.msra.mxu0 0.0
    %593 = vmatpush.xpose.msra.mxu0 0.0
    %594 = vmatpush.xpose.msra.mxu0 0.0
    %595 = vmatpush.xpose.msra.mxu0 0.0
    %596 = vmatpush.xpose.msra.mxu0 0.0
    %597 = vmatpush.xpose.msra.mxu0 0.0
    %598 = vmatpush.xpose.msra.mxu0 0.0
    %599 = vmatpush.xpose.msra.mxu0 0.0
    %600 = vmatpush.xpose.msra.mxu0 0.0
    %601 = vmatpush.xpose.msra.mxu0 0.0
    %602 = vmatpush.xpose.msra.mxu0 0.0
    %603 = vmatpush.xpose.msra.mxu0 0.0
    %604 = vmatpush.xpose.msra.mxu0 0.0
    %605 = vmatpush.xpose.msra.mxu0 %v588
    %606 = vmatmul.f32.gmra.mxu0 %v586
    %v607 = vpop.f32.mrf.mxu0
    %v608 = vadd.f32 0.0, %v607
    %609 = vdwg.mxu0
    %610 = vrot.lane.b32.xlu0 %v124, 80
    %v611 = vpop.permute.xlu0 %610
    %612 = vrot.lane.b32.xlu0 %v157, 80
    %v613 = vpop.permute.xlu0 %612
    %v614 = vsel %vm192, %v611, 0
    %v616 = vsel %vm192, %v613, 0
    %618 = vmatpush.xpose.msra.mxu0 0.0
    %619 = vmatpush.xpose.msra.mxu0 0.0
    %620 = vmatpush.xpose.msra.mxu0 0.0
    %621 = vmatpush.xpose.msra.mxu0 0.0
    %622 = vmatpush.xpose.msra.mxu0 0.0
    %623 = vmatpush.xpose.msra.mxu0 0.0
    %624 = vmatpush.xpose.msra.mxu0 0.0
    %625 = vmatpush.xpose.msra.mxu0 0.0
    %626 = vmatpush.xpose.msra.mxu0 0.0
    %627 = vmatpush.xpose.msra.mxu0 0.0
    %628 = vmatpush.xpose.msra.mxu0 0.0
    %629 = vmatpush.xpose.msra.mxu0 0.0
    %630 = vmatpush.xpose.msra.mxu0 0.0
    %631 = vmatpush.xpose.msra.mxu0 0.0
    %632 = vmatpush.xpose.msra.mxu0 0.0
    %633 = vmatpush.xpose.msra.mxu0 %v616
    %634 = vmatmul.f32.gmra.mxu0 %v614
    %v635 = vpop.f32.mrf.mxu0
    %v636 = vadd.f32 0.0, %v635
    %637 = vdwg.mxu0
    %v638 = vmul.f32 %v608, 0.24999994
    %v639 = vmul.f32 %v636, 0.24999994
    %v640 = vsel %vm247, %v638, -inf
    %641 = vmax.xlane.f32.xlu0 %v640
    %v642 = vpop.xlane.xlu0 %641
    %v643 = vsel %vm247, %v639, -inf
    %644 = vmax.xlane.f32.xlu0 %v643
    %v645 = vpop.xlane.xlu0 %644
    %v646 = vsub.f32 %v638, %v642
    %v647 = vsub.f32 %v639, %v645
    %v648 = vmul.f32 %v646, 1.442695
    %v649 = vpow.pop %v648
    %v650 = vmul.f32 %v647, 1.442695
    %v651 = vpow.pop %v650
    %v652 = vsel %vm247, %v649, 0.0
    %653 = vadd.xlane.f32.xlu0 %v652
    %v654 = vpop.xlane.xlu0 %653
    %v655 = vsel %vm247, %v651, 0.0
    %656 = vadd.xlane.f32.xlu0 %v655
    %v657 = vpop.xlane.xlu0 %656
    %v658 = vrcp.pop %v654
    %v659 = vrcp.pop %v657
    %660 = vrot.lane.b32.xlu0 %v187, 80
    %v661 = vpop.permute.xlu0 %660
    %v664 = vsel %vm247, %v649, 0
    %666 = vmatpush.msra.mxu0 0.0
    %667 = vmatpush.msra.mxu0 0.0
    %668 = vmatpush.msra.mxu0 0.0
    %669 = vmatpush.msra.mxu0 0.0
    %670 = vmatpush.msra.mxu0 0.0
    %671 = vmatpush.msra.mxu0 0.0
    %672 = vmatpush.msra.mxu0 0.0
    %673 = vmatpush.msra.mxu0 0.0
    %674 = vmatpush.msra.mxu0 0.0
    %675 = vmatpush.msra.mxu0 0.0
    %676 = vmatpush.msra.mxu0 0.0
    %677 = vmatpush.msra.mxu0 0.0
    %678 = vmatpush.msra.mxu0 0.0
    %679 = vmatpush.msra.mxu0 0.0
    %680 = vmatpush.msra.mxu0 0.0
    %681 = vmatpush.msra.mxu0 %v661
    %682 = vmatmul.f32.gmra.mxu0 %v664
    %v683 = vpop.f32.mrf.mxu0
    %v684 = vadd.f32 0.0, %v683
    %685 = vdwg.mxu0
    %686 = vrot.lane.b32.xlu0 %v190, 80
    %v687 = vpop.permute.xlu0 %686
    %v690 = vsel %vm247, %v651, 0
    %692 = vmatpush.msra.mxu0 0.0
    %693 = vmatpush.msra.mxu0 0.0
    %694 = vmatpush.msra.mxu0 0.0
    %695 = vmatpush.msra.mxu0 0.0
    %696 = vmatpush.msra.mxu0 0.0
    %697 = vmatpush.msra.mxu0 0.0
    %698 = vmatpush.msra.mxu0 0.0
    %699 = vmatpush.msra.mxu0 0.0
    %700 = vmatpush.msra.mxu0 0.0
    %701 = vmatpush.msra.mxu0 0.0
    %702 = vmatpush.msra.mxu0 0.0
    %703 = vmatpush.msra.mxu0 0.0
    %704 = vmatpush.msra.mxu0 0.0
    %705 = vmatpush.msra.mxu0 0.0
    %706 = vmatpush.msra.mxu0 0.0
    %707 = vmatpush.msra.mxu0 %v687
    %708 = vmatmul.f32.gmra.mxu0 %v690
    %v709 = vpop.f32.mrf.mxu0
    %v710 = vadd.f32 0.0, %v709
    %711 = vdwg.mxu0
    %v712 = vmul.f32 %v684, %v658
    %v713 = vmul.f32 %v710, %v659
    %714 = vrot.lane.b32.xlu0 %v121, 64
    %v715 = vpop.permute.xlu0 %714
    %716 = vrot.lane.b32.xlu0 %v154, 64
    %v717 = vpop.permute.xlu0 %716
    %v718 = vsel %vm192, %v715, 0
    %v720 = vsel %vm192, %v717, 0
    %722 = vmatpush.xpose.msra.mxu0 0.0
    %723 = vmatpush.xpose.msra.mxu0 0.0
    %724 = vmatpush.xpose.msra.mxu0 0.0
    %725 = vmatpush.xpose.msra.mxu0 0.0
    %726 = vmatpush.xpose.msra.mxu0 0.0
    %727 = vmatpush.xpose.msra.mxu0 0.0
    %728 = vmatpush.xpose.msra.mxu0 0.0
    %729 = vmatpush.xpose.msra.mxu0 0.0
    %730 = vmatpush.xpose.msra.mxu0 0.0
    %731 = vmatpush.xpose.msra.mxu0 0.0
    %732 = vmatpush.xpose.msra.mxu0 0.0
    %733 = vmatpush.xpose.msra.mxu0 0.0
    %734 = vmatpush.xpose.msra.mxu0 0.0
    %735 = vmatpush.xpose.msra.mxu0 0.0
    %736 = vmatpush.xpose.msra.mxu0 0.0
    %737 = vmatpush.xpose.msra.mxu0 %v720
    %738 = vmatmul.f32.gmra.mxu0 %v718
    %v739 = vpop.f32.mrf.mxu0
    %v740 = vadd.f32 0.0, %v739
    %741 = vdwg.mxu0
    %742 = vrot.lane.b32.xlu0 %v124, 64
    %v743 = vpop.permute.xlu0 %742
    %744 = vrot.lane.b32.xlu0 %v157, 64
    %v745 = vpop.permute.xlu0 %744
    %v746 = vsel %vm192, %v743, 0
    %v748 = vsel %vm192, %v745, 0
    %750 = vmatpush.xpose.msra.mxu0 0.0
    %751 = vmatpush.xpose.msra.mxu0 0.0
    %752 = vmatpush.xpose.msra.mxu0 0.0
    %753 = vmatpush.xpose.msra.mxu0 0.0
    %754 = vmatpush.xpose.msra.mxu0 0.0
    %755 = vmatpush.xpose.msra.mxu0 0.0
    %756 = vmatpush.xpose.msra.mxu0 0.0
    %757 = vmatpush.xpose.msra.mxu0 0.0
    %758 = vmatpush.xpose.msra.mxu0 0.0
    %759 = vmatpush.xpose.msra.mxu0 0.0
    %760 = vmatpush.xpose.msra.mxu0 0.0
    %761 = vmatpush.xpose.msra.mxu0 0.0
    %762 = vmatpush.xpose.msra.mxu0 0.0
    %763 = vmatpush.xpose.msra.mxu0 0.0
    %764 = vmatpush.xpose.msra.mxu0 0.0
    %765 = vmatpush.xpose.msra.mxu0 %v748
    %766 = vmatmul.f32.gmra.mxu0 %v746
    %v767 = vpop.f32.mrf.mxu0
    %v768 = vadd.f32 0.0, %v767
    %769 = vdwg.mxu0
    %v770 = vmul.f32 %v740, 0.24999994
    %v771 = vmul.f32 %v768, 0.24999994
    %v772 = vsel %vm247, %v770, -inf
    %773 = vmax.xlane.f32.xlu0 %v772
    %v774 = vpop.xlane.xlu0 %773
    %v775 = vsel %vm247, %v771, -inf
    %776 = vmax.xlane.f32.xlu0 %v775
    %v777 = vpop.xlane.xlu0 %776
    %v778 = vsub.f32 %v770, %v774
    %v779 = vsub.f32 %v771, %v777
    %v780 = vmul.f32 %v778, 1.442695
    %v781 = vpow.pop %v780
    %v782 = vmul.f32 %v779, 1.442695
    %v783 = vpow.pop %v782
    %v784 = vsel %vm247, %v781, 0.0
    %785 = vadd.xlane.f32.xlu0 %v784
    %v786 = vpop.xlane.xlu0 %785
    %v787 = vsel %vm247, %v783, 0.0
    %788 = vadd.xlane.f32.xlu0 %v787
    %v789 = vpop.xlane.xlu0 %788
    %v790 = vrcp.pop %v786
    %v791 = vrcp.pop %v789
    %792 = vrot.lane.b32.xlu0 %v187, 64
    %v793 = vpop.permute.xlu0 %792
    %v796 = vsel %vm247, %v781, 0
    %798 = vmatpush.msra.mxu0 0.0
    %799 = vmatpush.msra.mxu0 0.0
    %800 = vmatpush.msra.mxu0 0.0
    %801 = vmatpush.msra.mxu0 0.0
    %802 = vmatpush.msra.mxu0 0.0
    %803 = vmatpush.msra.mxu0 0.0
    %804 = vmatpush.msra.mxu0 0.0
    %805 = vmatpush.msra.mxu0 0.0
    %806 = vmatpush.msra.mxu0 0.0
    %807 = vmatpush.msra.mxu0 0.0
    %808 = vmatpush.msra.mxu0 0.0
    %809 = vmatpush.msra.mxu0 0.0
    %810 = vmatpush.msra.mxu0 0.0
    %811 = vmatpush.msra.mxu0 0.0
    %812 = vmatpush.msra.mxu0 0.0
    %813 = vmatpush.msra.mxu0 %v793
    %814 = vmatmul.f32.gmra.mxu0 %v796
    %v815 = vpop.f32.mrf.mxu0
    %v816 = vadd.f32 0.0, %v815
    %817 = vdwg.mxu0
    %818 = vrot.lane.b32.xlu0 %v190, 64
    %v819 = vpop.permute.xlu0 %818
    %v822 = vsel %vm247, %v783, 0
    %824 = vmatpush.msra.mxu0 0.0
    %825 = vmatpush.msra.mxu0 0.0
    %826 = vmatpush.msra.mxu0 0.0
    %827 = vmatpush.msra.mxu0 0.0
    %828 = vmatpush.msra.mxu0 0.0
    %829 = vmatpush.msra.mxu0 0.0
    %830 = vmatpush.msra.mxu0 0.0
    %831 = vmatpush.msra.mxu0 0.0
    %832 = vmatpush.msra.mxu0 0.0
    %833 = vmatpush.msra.mxu0 0.0
    %834 = vmatpush.msra.mxu0 0.0
    %835 = vmatpush.msra.mxu0 0.0
    %836 = vmatpush.msra.mxu0 0.0
    %837 = vmatpush.msra.mxu0 0.0
    %838 = vmatpush.msra.mxu0 0.0
    %839 = vmatpush.msra.mxu0 %v819
    %840 = vmatmul.f32.gmra.mxu0 %v822
    %v841 = vpop.f32.mrf.mxu0
    %v842 = vadd.f32 0.0, %v841
    %843 = vdwg.mxu0
    %v844 = vmul.f32 %v816, %v790
    %v845 = vmul.f32 %v842, %v791
    %846 = vrot.lane.b32.xlu0 %v121, 48
    %v847 = vpop.permute.xlu0 %846
    %848 = vrot.lane.b32.xlu0 %v154, 48
    %v849 = vpop.permute.xlu0 %848
    %v850 = vsel %vm192, %v847, 0
    %v852 = vsel %vm192, %v849, 0
    %854 = vmatpush.xpose.msra.mxu0 0.0
    %855 = vmatpush.xpose.msra.mxu0 0.0
    %856 = vmatpush.xpose.msra.mxu0 0.0
    %857 = vmatpush.xpose.msra.mxu0 0.0
    %858 = vmatpush.xpose.msra.mxu0 0.0
    %859 = vmatpush.xpose.msra.mxu0 0.0
    %860 = vmatpush.xpose.msra.mxu0 0.0
    %861 = vmatpush.xpose.msra.mxu0 0.0
    %862 = vmatpush.xpose.msra.mxu0 0.0
    %863 = vmatpush.xpose.msra.mxu0 0.0
    %864 = vmatpush.xpose.msra.mxu0 0.0
    %865 = vmatpush.xpose.msra.mxu0 0.0
    %866 = vmatpush.xpose.msra.mxu0 0.0
    %867 = vmatpush.xpose.msra.mxu0 0.0
    %868 = vmatpush.xpose.msra.mxu0 0.0
    %869 = vmatpush.xpose.msra.mxu0 %v852
    %870 = vmatmul.f32.gmra.mxu0 %v850
    %v871 = vpop.f32.mrf.mxu0
    %v872 = vadd.f32 0.0, %v871
    %873 = vdwg.mxu0
    %874 = vrot.lane.b32.xlu0 %v124, 48
    %v875 = vpop.permute.xlu0 %874
    %876 = vrot.lane.b32.xlu0 %v157, 48
    %v877 = vpop.permute.xlu0 %876
    %v878 = vsel %vm192, %v875, 0
    %v880 = vsel %vm192, %v877, 0
    %882 = vmatpush.xpose.msra.mxu0 0.0
    %883 = vmatpush.xpose.msra.mxu0 0.0
    %884 = vmatpush.xpose.msra.mxu0 0.0
    %885 = vmatpush.xpose.msra.mxu0 0.0
    %886 = vmatpush.xpose.msra.mxu0 0.0
    %887 = vmatpush.xpose.msra.mxu0 0.0
    %888 = vmatpush.xpose.msra.mxu0 0.0
    %889 = vmatpush.xpose.msra.mxu0 0.0
    %890 = vmatpush.xpose.msra.mxu0 0.0
    %891 = vmatpush.xpose.msra.mxu0 0.0
    %892 = vmatpush.xpose.msra.mxu0 0.0
    %893 = vmatpush.xpose.msra.mxu0 0.0
    %894 = vmatpush.xpose.msra.mxu0 0.0
    %895 = vmatpush.xpose.msra.mxu0 0.0
    %896 = vmatpush.xpose.msra.mxu0 0.0
    %897 = vmatpush.xpose.msra.mxu0 %v880
    %898 = vmatmul.f32.gmra.mxu0 %v878
    %v899 = vpop.f32.mrf.mxu0
    %v900 = vadd.f32 0.0, %v899
    %901 = vdwg.mxu0
    %v902 = vmul.f32 %v872, 0.24999994
    %v903 = vmul.f32 %v900, 0.24999994
    %v904 = vsel %vm247, %v902, -inf
    %905 = vmax.xlane.f32.xlu0 %v904
    %v906 = vpop.xlane.xlu0 %905
    %v907 = vsel %vm247, %v903, -inf
    %908 = vmax.xlane.f32.xlu0 %v907
    %v909 = vpop.xlane.xlu0 %908
    %v910 = vsub.f32 %v902, %v906
    %v911 = vsub.f32 %v903, %v909
    %v912 = vmul.f32 %v910, 1.442695
    %v913 = vpow.pop %v912
    %v914 = vmul.f32 %v911, 1.442695
    %v915 = vpow.pop %v914
    %v916 = vsel %vm247, %v913, 0.0
    %917 = vadd.xlane.f32.xlu0 %v916
    %v918 = vpop.xlane.xlu0 %917
    %v919 = vsel %vm247, %v915, 0.0
    %920 = vadd.xlane.f32.xlu0 %v919
    %v921 = vpop.xlane.xlu0 %920
    %v922 = vrcp.pop %v918
    %v923 = vrcp.pop %v921
    %924 = vrot.lane.b32.xlu0 %v187, 48
    %v925 = vpop.permute.xlu0 %924
    %v928 = vsel %vm247, %v913, 0
    %930 = vmatpush.msra.mxu0 0.0
    %931 = vmatpush.msra.mxu0 0.0
    %932 = vmatpush.msra.mxu0 0.0
    %933 = vmatpush.msra.mxu0 0.0
    %934 = vmatpush.msra.mxu0 0.0
    %935 = vmatpush.msra.mxu0 0.0
    %936 = vmatpush.msra.mxu0 0.0
    %937 = vmatpush.msra.mxu0 0.0
    %938 = vmatpush.msra.mxu0 0.0
    %939 = vmatpush.msra.mxu0 0.0
    %940 = vmatpush.msra.mxu0 0.0
    %941 = vmatpush.msra.mxu0 0.0
    %942 = vmatpush.msra.mxu0 0.0
    %943 = vmatpush.msra.mxu0 0.0
    %944 = vmatpush.msra.mxu0 0.0
    %945 = vmatpush.msra.mxu0 %v925
    %946 = vmatmul.f32.gmra.mxu0 %v928
    %v947 = vpop.f32.mrf.mxu0
    %v948 = vadd.f32 0.0, %v947
    %949 = vdwg.mxu0
    %950 = vrot.lane.b32.xlu0 %v190, 48
    %v951 = vpop.permute.xlu0 %950
    %v954 = vsel %vm247, %v915, 0
    %956 = vmatpush.msra.mxu0 0.0
    %957 = vmatpush.msra.mxu0 0.0
    %958 = vmatpush.msra.mxu0 0.0
    %959 = vmatpush.msra.mxu0 0.0
    %960 = vmatpush.msra.mxu0 0.0
    %961 = vmatpush.msra.mxu0 0.0
    %962 = vmatpush.msra.mxu0 0.0
    %963 = vmatpush.msra.mxu0 0.0
    %964 = vmatpush.msra.mxu0 0.0
    %965 = vmatpush.msra.mxu0 0.0
    %966 = vmatpush.msra.mxu0 0.0
    %967 = vmatpush.msra.mxu0 0.0
    %968 = vmatpush.msra.mxu0 0.0
    %969 = vmatpush.msra.mxu0 0.0
    %970 = vmatpush.msra.mxu0 0.0
    %971 = vmatpush.msra.mxu0 %v951
    %972 = vmatmul.f32.gmra.mxu0 %v954
    %v973 = vpop.f32.mrf.mxu0
    %v974 = vadd.f32 0.0, %v973
    %975 = vdwg.mxu0
    %v976 = vmul.f32 %v948, %v922
    %v977 = vmul.f32 %v974, %v923
    %978 = vrot.lane.b32.xlu0 %v121, 32
    %v979 = vpop.permute.xlu0 %978
    %980 = vrot.lane.b32.xlu0 %v154, 32
    %v981 = vpop.permute.xlu0 %980
    %v982 = vsel %vm192, %v979, 0
    %v984 = vsel %vm192, %v981, 0
    %986 = vmatpush.xpose.msra.mxu0 0.0
    %987 = vmatpush.xpose.msra.mxu0 0.0
    %988 = vmatpush.xpose.msra.mxu0 0.0
    %989 = vmatpush.xpose.msra.mxu0 0.0
    %990 = vmatpush.xpose.msra.mxu0 0.0
    %991 = vmatpush.xpose.msra.mxu0 0.0
    %992 = vmatpush.xpose.msra.mxu0 0.0
    %993 = vmatpush.xpose.msra.mxu0 0.0
    %994 = vmatpush.xpose.msra.mxu0 0.0
    %995 = vmatpush.xpose.msra.mxu0 0.0
    %996 = vmatpush.xpose.msra.mxu0 0.0
    %997 = vmatpush.xpose.msra.mxu0 0.0
    %998 = vmatpush.xpose.msra.mxu0 0.0
    %999 = vmatpush.xpose.msra.mxu0 0.0
    %1000 = vmatpush.xpose.msra.mxu0 0.0
    %1001 = vmatpush.xpose.msra.mxu0 %v984
    %1002 = vmatmul.f32.gmra.mxu0 %v982
    %v1003 = vpop.f32.mrf.mxu0
    %v1004 = vadd.f32 0.0, %v1003
    %1005 = vdwg.mxu0
    %1006 = vrot.lane.b32.xlu0 %v124, 32
    %v1007 = vpop.permute.xlu0 %1006
    %1008 = vrot.lane.b32.xlu0 %v157, 32
    %v1009 = vpop.permute.xlu0 %1008
    %v1010 = vsel %vm192, %v1007, 0
    %v1012 = vsel %vm192, %v1009, 0
    %1014 = vmatpush.xpose.msra.mxu0 0.0
    %1015 = vmatpush.xpose.msra.mxu0 0.0
    %1016 = vmatpush.xpose.msra.mxu0 0.0
    %1017 = vmatpush.xpose.msra.mxu0 0.0
    %1018 = vmatpush.xpose.msra.mxu0 0.0
    %1019 = vmatpush.xpose.msra.mxu0 0.0
    %1020 = vmatpush.xpose.msra.mxu0 0.0
    %1021 = vmatpush.xpose.msra.mxu0 0.0
    %1022 = vmatpush.xpose.msra.mxu0 0.0
    %1023 = vmatpush.xpose.msra.mxu0 0.0
    %1024 = vmatpush.xpose.msra.mxu0 0.0
    %1025 = vmatpush.xpose.msra.mxu0 0.0
    %1026 = vmatpush.xpose.msra.mxu0 0.0
    %1027 = vmatpush.xpose.msra.mxu0 0.0
    %1028 = vmatpush.xpose.msra.mxu0 0.0
    %1029 = vmatpush.xpose.msra.mxu0 %v1012
    %1030 = vmatmul.f32.gmra.mxu0 %v1010
    %v1031 = vpop.f32.mrf.mxu0
    %v1032 = vadd.f32 0.0, %v1031
    %1033 = vdwg.mxu0
    %v1034 = vmul.f32 %v1004, 0.24999994
    %v1035 = vmul.f32 %v1032, 0.24999994
    %v1036 = vsel %vm247, %v1034, -inf
    %1037 = vmax.xlane.f32.xlu0 %v1036
    %v1038 = vpop.xlane.xlu0 %1037
    %v1039 = vsel %vm247, %v1035, -inf
    %1040 = vmax.xlane.f32.xlu0 %v1039
    %v1041 = vpop.xlane.xlu0 %1040
    %v1042 = vsub.f32 %v1034, %v1038
    %v1043 = vsub.f32 %v1035, %v1041
    %v1044 = vmul.f32 %v1042, 1.442695
    %v1045 = vpow.pop %v1044
    %v1046 = vmul.f32 %v1043, 1.442695
    %v1047 = vpow.pop %v1046
    %v1048 = vsel %vm247, %v1045, 0.0
    %1049 = vadd.xlane.f32.xlu0 %v1048
    %v1050 = vpop.xlane.xlu0 %1049
    %v1051 = vsel %vm247, %v1047, 0.0
    %1052 = vadd.xlane.f32.xlu0 %v1051
    %v1053 = vpop.xlane.xlu0 %1052
    %v1054 = vrcp.pop %v1050
    %v1055 = vrcp.pop %v1053
    %1056 = vrot.lane.b32.xlu0 %v187, 32
    %v1057 = vpop.permute.xlu0 %1056
    %v1060 = vsel %vm247, %v1045, 0
    %1062 = vmatpush.msra.mxu0 0.0
    %1063 = vmatpush.msra.mxu0 0.0
    %1064 = vmatpush.msra.mxu0 0.0
    %1065 = vmatpush.msra.mxu0 0.0
    %1066 = vmatpush.msra.mxu0 0.0
    %1067 = vmatpush.msra.mxu0 0.0
    %1068 = vmatpush.msra.mxu0 0.0
    %1069 = vmatpush.msra.mxu0 0.0
    %1070 = vmatpush.msra.mxu0 0.0
    %1071 = vmatpush.msra.mxu0 0.0
    %1072 = vmatpush.msra.mxu0 0.0
    %1073 = vmatpush.msra.mxu0 0.0
    %1074 = vmatpush.msra.mxu0 0.0
    %1075 = vmatpush.msra.mxu0 0.0
    %1076 = vmatpush.msra.mxu0 0.0
    %1077 = vmatpush.msra.mxu0 %v1057
    %1078 = vmatmul.f32.gmra.mxu0 %v1060
    %v1079 = vpop.f32.mrf.mxu0
    %v1080 = vadd.f32 0.0, %v1079
    %1081 = vdwg.mxu0
    %1082 = vrot.lane.b32.xlu0 %v190, 32
    %v1083 = vpop.permute.xlu0 %1082
    %v1086 = vsel %vm247, %v1047, 0
    %1088 = vmatpush.msra.mxu0 0.0
    %1089 = vmatpush.msra.mxu0 0.0
    %1090 = vmatpush.msra.mxu0 0.0
    %1091 = vmatpush.msra.mxu0 0.0
    %1092 = vmatpush.msra.mxu0 0.0
    %1093 = vmatpush.msra.mxu0 0.0
    %1094 = vmatpush.msra.mxu0 0.0
    %1095 = vmatpush.msra.mxu0 0.0
    %1096 = vmatpush.msra.mxu0 0.0
    %1097 = vmatpush.msra.mxu0 0.0
    %1098 = vmatpush.msra.mxu0 0.0
    %1099 = vmatpush.msra.mxu0 0.0
    %1100 = vmatpush.msra.mxu0 0.0
    %1101 = vmatpush.msra.mxu0 0.0
    %1102 = vmatpush.msra.mxu0 0.0
    %1103 = vmatpush.msra.mxu0 %v1083
    %1104 = vmatmul.f32.gmra.mxu0 %v1086
    %v1105 = vpop.f32.mrf.mxu0
    %v1106 = vadd.f32 0.0, %v1105
    %1107 = vdwg.mxu0
    %v1108 = vmul.f32 %v1080, %v1054
    %v1109 = vmul.f32 %v1106, %v1055
    %1110 = vrot.lane.b32.xlu0 %v121, 16
    %v1111 = vpop.permute.xlu0 %1110
    %1112 = vrot.lane.b32.xlu0 %v154, 16
    %v1113 = vpop.permute.xlu0 %1112
    %v1114 = vsel %vm192, %v1111, 0
    %v1116 = vsel %vm192, %v1113, 0
    %1118 = vmatpush.xpose.msra.mxu0 0.0
    %1119 = vmatpush.xpose.msra.mxu0 0.0
    %1120 = vmatpush.xpose.msra.mxu0 0.0
    %1121 = vmatpush.xpose.msra.mxu0 0.0
    %1122 = vmatpush.xpose.msra.mxu0 0.0
    %1123 = vmatpush.xpose.msra.mxu0 0.0
    %1124 = vmatpush.xpose.msra.mxu0 0.0
    %1125 = vmatpush.xpose.msra.mxu0 0.0
    %1126 = vmatpush.xpose.msra.mxu0 0.0
    %1127 = vmatpush.xpose.msra.mxu0 0.0
    %1128 = vmatpush.xpose.msra.mxu0 0.0
    %1129 = vmatpush.xpose.msra.mxu0 0.0
    %1130 = vmatpush.xpose.msra.mxu0 0.0
    %1131 = vmatpush.xpose.msra.mxu0 0.0
    %1132 = vmatpush.xpose.msra.mxu0 0.0
    %1133 = vmatpush.xpose.msra.mxu0 %v1116
    %1134 = vmatmul.f32.gmra.mxu0 %v1114
    %v1135 = vpop.f32.mrf.mxu0
    %v1136 = vadd.f32 0.0, %v1135
    %1137 = vdwg.mxu0
    %1138 = vrot.lane.b32.xlu0 %v124, 16
    %v1139 = vpop.permute.xlu0 %1138
    %1140 = vrot.lane.b32.xlu0 %v157, 16
    %v1141 = vpop.permute.xlu0 %1140
    %v1142 = vsel %vm192, %v1139, 0
    %v1144 = vsel %vm192, %v1141, 0
    %1146 = vmatpush.xpose.msra.mxu0 0.0
    %1147 = vmatpush.xpose.msra.mxu0 0.0
    %1148 = vmatpush.xpose.msra.mxu0 0.0
    %1149 = vmatpush.xpose.msra.mxu0 0.0
    %1150 = vmatpush.xpose.msra.mxu0 0.0
    %1151 = vmatpush.xpose.msra.mxu0 0.0
    %1152 = vmatpush.xpose.msra.mxu0 0.0
    %1153 = vmatpush.xpose.msra.mxu0 0.0
    %1154 = vmatpush.xpose.msra.mxu0 0.0
    %1155 = vmatpush.xpose.msra.mxu0 0.0
    %1156 = vmatpush.xpose.msra.mxu0 0.0
    %1157 = vmatpush.xpose.msra.mxu0 0.0
    %1158 = vmatpush.xpose.msra.mxu0 0.0
    %1159 = vmatpush.xpose.msra.mxu0 0.0
    %1160 = vmatpush.xpose.msra.mxu0 0.0
    %1161 = vmatpush.xpose.msra.mxu0 %v1144
    %1162 = vmatmul.f32.gmra.mxu0 %v1142
    %v1163 = vpop.f32.mrf.mxu0
    %v1164 = vadd.f32 0.0, %v1163
    %1165 = vdwg.mxu0
    %v1166 = vmul.f32 %v1136, 0.24999994
    %v1167 = vmul.f32 %v1164, 0.24999994
    %v1168 = vsel %vm247, %v1166, -inf
    %1169 = vmax.xlane.f32.xlu0 %v1168
    %v1170 = vpop.xlane.xlu0 %1169
    %v1171 = vsel %vm247, %v1167, -inf
    %1172 = vmax.xlane.f32.xlu0 %v1171
    %v1173 = vpop.xlane.xlu0 %1172
    %v1174 = vsub.f32 %v1166, %v1170
    %v1175 = vsub.f32 %v1167, %v1173
    %v1176 = vmul.f32 %v1174, 1.442695
    %v1177 = vpow.pop %v1176
    %v1178 = vmul.f32 %v1175, 1.442695
    %v1179 = vpow.pop %v1178
    %v1180 = vsel %vm247, %v1177, 0.0
    %1181 = vadd.xlane.f32.xlu0 %v1180
    %v1182 = vpop.xlane.xlu0 %1181
    %v1183 = vsel %vm247, %v1179, 0.0
    %1184 = vadd.xlane.f32.xlu0 %v1183
    %v1185 = vpop.xlane.xlu0 %1184
    %v1186 = vrcp.pop %v1182
    %v1187 = vrcp.pop %v1185
    %1188 = vrot.lane.b32.xlu0 %v187, 16
    %v1189 = vpop.permute.xlu0 %1188
    %v1192 = vsel %vm247, %v1177, 0
    %1194 = vmatpush.msra.mxu0 0.0
    %1195 = vmatpush.msra.mxu0 0.0
    %1196 = vmatpush.msra.mxu0 0.0
    %1197 = vmatpush.msra.mxu0 0.0
    %1198 = vmatpush.msra.mxu0 0.0
    %1199 = vmatpush.msra.mxu0 0.0
    %1200 = vmatpush.msra.mxu0 0.0
    %1201 = vmatpush.msra.mxu0 0.0
    %1202 = vmatpush.msra.mxu0 0.0
    %1203 = vmatpush.msra.mxu0 0.0
    %1204 = vmatpush.msra.mxu0 0.0
    %1205 = vmatpush.msra.mxu0 0.0
    %1206 = vmatpush.msra.mxu0 0.0
    %1207 = vmatpush.msra.mxu0 0.0
    %1208 = vmatpush.msra.mxu0 0.0
    %1209 = vmatpush.msra.mxu0 %v1189
    %1210 = vmatmul.f32.gmra.mxu0 %v1192
    %v1211 = vpop.f32.mrf.mxu0
    %v1212 = vadd.f32 0.0, %v1211
    %1213 = vdwg.mxu0
    %1214 = vrot.lane.b32.xlu0 %v190, 16
    %v1215 = vpop.permute.xlu0 %1214
    %v1218 = vsel %vm247, %v1179, 0
    %1220 = vmatpush.msra.mxu0 0.0
    %1221 = vmatpush.msra.mxu0 0.0
    %1222 = vmatpush.msra.mxu0 0.0
    %1223 = vmatpush.msra.mxu0 0.0
    %1224 = vmatpush.msra.mxu0 0.0
    %1225 = vmatpush.msra.mxu0 0.0
    %1226 = vmatpush.msra.mxu0 0.0
    %1227 = vmatpush.msra.mxu0 0.0
    %1228 = vmatpush.msra.mxu0 0.0
    %1229 = vmatpush.msra.mxu0 0.0
    %1230 = vmatpush.msra.mxu0 0.0
    %1231 = vmatpush.msra.mxu0 0.0
    %1232 = vmatpush.msra.mxu0 0.0
    %1233 = vmatpush.msra.mxu0 0.0
    %1234 = vmatpush.msra.mxu0 0.0
    %1235 = vmatpush.msra.mxu0 %v1215
    %1236 = vmatmul.f32.gmra.mxu0 %v1218
    %v1237 = vpop.f32.mrf.mxu0
    %v1238 = vadd.f32 0.0, %v1237
    %1239 = vdwg.mxu0
    %v1240 = vmul.f32 %v1212, %v1186
    %v1241 = vmul.f32 %v1238, %v1187
    %1244 = vrot.lane.b32.xlu0 %v448, 16
    %v1245 = vpop.permute.xlu0 %1244
    %1246 = vrot.lane.b32.xlu0 %v449, 16
    %v1247 = vpop.permute.xlu0 %1246
    %1252 = vrot.lane.b32.xlu0 %v580, 32
    %v1253 = vpop.permute.xlu0 %1252
    %1254 = vrot.lane.b32.xlu0 %v581, 32
    %v1255 = vpop.permute.xlu0 %1254
    %1260 = vrot.lane.b32.xlu0 %v712, 48
    %v1261 = vpop.permute.xlu0 %1260
    %1262 = vrot.lane.b32.xlu0 %v713, 48
    %v1263 = vpop.permute.xlu0 %1262
    %1268 = vrot.lane.b32.xlu0 %v844, 64
    %v1269 = vpop.permute.xlu0 %1268
    %1270 = vrot.lane.b32.xlu0 %v845, 64
    %v1271 = vpop.permute.xlu0 %1270
    %1276 = vrot.lane.b32.xlu0 %v976, 80
    %v1277 = vpop.permute.xlu0 %1276
    %1278 = vrot.lane.b32.xlu0 %v977, 80
    %v1279 = vpop.permute.xlu0 %1278
    %1284 = vrot.lane.b32.xlu0 %v1108, 96
    %v1285 = vpop.permute.xlu0 %1284
    %1286 = vrot.lane.b32.xlu0 %v1109, 96
    %v1287 = vpop.permute.xlu0 %1286
    %1292 = vrot.lane.b32.xlu0 %v1240, 112
    %v1293 = vpop.permute.xlu0 %1292
    %1294 = vrot.lane.b32.xlu0 %v1241, 112
    %v1295 = vpop.permute.xlu0 %1294
    %v1298 = vsel %vm192, %v314, %v1245
    %v1299 = vsel %vm192, %v315, %v1247
    %v1300 = vsel %vm96, %v1298, %v1253
    %v1301 = vsel %vm96, %v1299, %v1255
    %vm1302 = vcmask 392192
    %v1303 = vsel %vm1302, %v1300, %v1261
    %v1304 = vsel %vm1302, %v1301, %v1263
    %vm1305 = vcmask 523264
    %v1306 = vsel %vm1305, %v1303, %v1269
    %v1307 = vsel %vm1305, %v1304, %v1271
    %vm1308 = vcmask 654336
    %v1309 = vsel %vm1308, %v1306, %v1277
    %v1310 = vsel %vm1308, %v1307, %v1279
    %vm1311 = vcmask 785408
    %v1312 = vsel %vm1311, %v1309, %v1285
    %v1313 = vsel %vm1311, %v1310, %v1287
    %vm1314 = vcmask 916480
    %v1315 = vsel %vm1314, %v1312, %v1293
    %v1316 = vsel %vm1314, %v1313, %v1295
    %v1317 = vld [vmem:[%s6] sm:$0xff]
    %v1318 = vld [vmem:[%s6 + $0x8] sm:$0xff]
    %v1319 = vld [vmem:[%s6 + $0x10] sm:$0xff]
    %v1320 = vld [vmem:[%s6 + $0x18] sm:$0xff]
    %v1321 = vld [vmem:[%s6 + $0x20] sm:$0xff]
    %v1322 = vld [vmem:[%s6 + $0x28] sm:$0xff]
    %v1323 = vld [vmem:[%s6 + $0x30] sm:$0xff]
    %v1324 = vld [vmem:[%s6 + $0x38] sm:$0xff]
    %v1325 = vld [vmem:[%s6 + $0x40] sm:$0xff]
    %v1326 = vld [vmem:[%s6 + $0x48] sm:$0xff]
    %v1327 = vld [vmem:[%s6 + $0x50] sm:$0xff]
    %v1328 = vld [vmem:[%s6 + $0x58] sm:$0xff]
    %v1329 = vld [vmem:[%s6 + $0x60] sm:$0xff]
    %v1330 = vld [vmem:[%s6 + $0x68] sm:$0xff]
    %v1331 = vld [vmem:[%s6 + $0x70] sm:$0xff]
    %v1332 = vld [vmem:[%s6 + $0x78] sm:$0xff]
    %1333 = vmatpush.msra.mxu0 %v1332
    %1334 = vmatpush.msra.mxu0 %v1331
    %1335 = vmatpush.msra.mxu0 %v1330
    %1336 = vmatpush.msra.mxu0 %v1329
    %1337 = vmatpush.msra.mxu0 %v1328
    %1338 = vmatpush.msra.mxu0 %v1327
    %1339 = vmatpush.msra.mxu0 %v1326
    %1340 = vmatpush.msra.mxu0 %v1325
    %1341 = vmatpush.msra.mxu0 %v1324
    %1342 = vmatpush.msra.mxu0 %v1323
    %1343 = vmatpush.msra.mxu0 %v1322
    %1344 = vmatpush.msra.mxu0 %v1321
    %1345 = vmatpush.msra.mxu0 %v1320
    %1346 = vmatpush.msra.mxu0 %v1319
    %1347 = vmatpush.msra.mxu0 %v1318
    %1348 = vmatpush.msra.mxu0 %v1317
    %1349 = vmatmul.f32.gmra.mxu0 %v1315
    %v1350 = vpop.f32.mrf.mxu0
    %v1351 = vadd.f32 0.0, %v1350
    %1352 = vmatmul.f32.gmra.mxu0 %v1316
    %v1353 = vpop.f32.mrf.mxu0
    %v1354 = vadd.f32 0.0, %v1353
    %1355 = vdwg.mxu0
    %v1356 = vadd.f32 %v86, %v1351
    %v1357 = vadd.f32 %v87, %v1354
    %v1358 = vld [vmem:[%s7] sm:$0xff]
    %v1359 = vld [vmem:[%s7 + $0x8] sm:$0xff]
    %v1360 = vld [vmem:[%s7 + $0x10] sm:$0xff]
    %v1361 = vld [vmem:[%s7 + $0x18] sm:$0xff]
    %v1362 = vld [vmem:[%s8] sm:$0x1]
    %v1364 = vperm.slane %v1362, 0
    %v1367 = vsel %vm96, %v1356, 0
    %v1370 = vsel %vm96, %v1357, 0
    %1372 = vmatpush.msra.mxu0 0.0
    %1373 = vmatpush.msra.mxu0 0.0
    %1374 = vmatpush.msra.mxu0 0.0
    %1375 = vmatpush.msra.mxu0 0.0
    %1376 = vmatpush.msra.mxu0 0.0
    %1377 = vmatpush.msra.mxu0 0.0
    %1378 = vmatpush.msra.mxu0 0.0
    %1379 = vmatpush.msra.mxu0 0.0
    %1380 = vmatpush.msra.mxu0 0.0
    %1381 = vmatpush.msra.mxu0 0.0
    %1382 = vmatpush.msra.mxu0 0.0
    %1383 = vmatpush.msra.mxu0 0.0
    %1384 = vmatpush.msra.mxu0 %v1361
    %1385 = vmatpush.msra.mxu0 %v1360
    %1386 = vmatpush.msra.mxu0 %v1359
    %1387 = vmatpush.msra.mxu0 %v1358
    %1388 = vmatmul.f32.gmra.mxu0 %v1367
    %v1389 = vpop.f32.mrf.mxu0
    %v1390 = vadd.f32 %v1364, %v1389
    %1391 = vmatmul.f32.gmra.mxu0 %v1370
    %v1392 = vpop.f32.mrf.mxu0
    %v1393 = vadd.f32 %v1364, %v1392
    %1394 = vdwg.mxu0
    %v1395 = vmax.f32 %v1390, 0.0
    %v1396 = vmax.f32 %v1393, 0.0
    %v1397 = vld [vmem:[%s9] sm:$0xff]
    %v1398 = vld [vmem:[%s9 + $0x8] sm:$0xff]
    %v1399 = vld [vmem:[%s9 + $0x10] sm:$0xff]
    %v1400 = vld [vmem:[%s9 + $0x18] sm:$0xff]
    %v1401 = vld [vmem:[%s10] sm:$0x1]
    %v1403 = vperm.slane %v1401, 0
    %v1406 = vsel %vm96, %v1395, 0
    %v1409 = vsel %vm96, %v1396, 0
    %1411 = vmatpush.msra.mxu0 0.0
    %1412 = vmatpush.msra.mxu0 0.0
    %1413 = vmatpush.msra.mxu0 0.0
    %1414 = vmatpush.msra.mxu0 0.0
    %1415 = vmatpush.msra.mxu0 0.0
    %1416 = vmatpush.msra.mxu0 0.0
    %1417 = vmatpush.msra.mxu0 0.0
    %1418 = vmatpush.msra.mxu0 0.0
    %1419 = vmatpush.msra.mxu0 0.0
    %1420 = vmatpush.msra.mxu0 0.0
    %1421 = vmatpush.msra.mxu0 0.0
    %1422 = vmatpush.msra.mxu0 0.0
    %1423 = vmatpush.msra.mxu0 %v1400
    %1424 = vmatpush.msra.mxu0 %v1399
    %1425 = vmatpush.msra.mxu0 %v1398
    %1426 = vmatpush.msra.mxu0 %v1397
    %1427 = vmatmul.f32.gmra.mxu0 %v1406
    %v1428 = vpop.f32.mrf.mxu0
    %v1429 = vadd.f32 %v1403, %v1428
    %1430 = vmatmul.f32.gmra.mxu0 %v1409
    %v1431 = vpop.f32.mrf.mxu0
    %v1432 = vadd.f32 %v1403, %v1431
    %1433 = vdwg.mxu0
    %v1434 = vadd.f32 %v1429, %v1356
    %v1435 = vadd.f32 %v1432, %v1357
    %1436 = vst.msk [vmem:[#allocation8] sm:$0xff] %vm96, %v1434
    %1437 = vst.msk [vmem:[#allocation8 + $0x8] sm:$0xff] %vm96, %v1435
    // Predicated region
    $region58: #{tpu_custom_call.1} parent=1 // pred_check
      _
    $region59: #{tpu_custom_call.1} parent=1 // pred_check_branch
      %1439 = sbr.rel (0) target = $region61
    $region60: #{tpu_custom_call.1} parent=1 // pred_region
      %1441 = vsyncadd [#allocation4], 0
      %s1442 = sshll.u32 [#allocation8], 4
      %s1443 = int_to_ptr.vmem [resolvable:$true] %s1442
      %s1444 = sshll.u32 %s11, 4
      %s1445 = int_to_ptr.hbm [resolvable:$true] %s1444
      %1450 = dma.vmem_to_hbm [thread:$0]  %s1443, 256, %s1445, [#allocation4], 128, 128, 8
    $region61: #{tpu_custom_call.1} parent=1 // pred_fallthru
      _
    // Predicated region
    $region62: #{tpu_custom_call.1} parent=1 // pred_check
      _
    $region63: #{tpu_custom_call.1} parent=1 // pred_check_branch
      %1452 = sbr.rel (0) target = $region65
    $region64: #{tpu_custom_call.1} parent=1 // pred_region
      %1454 = dma.done [#allocation4], 256
    $region65: #{tpu_custom_call.1} parent=1 // pred_fallthru
      _
    %1455 = vsyncpa [#allocation3], 1
    %1456 = vsyncpa [#allocation6], 1
    %1457 = vsyncpa [#allocation4], 1

</llo_original>
